<compile_context>
chip_gen: v7x
topology: tpu7x:2x2x1
jax: 0.10.0
libtpu: 0.0.40
codegen_flags: <defaults>
</compile_context>

<pallas_src>
import functools

import jax
import jax.numpy as jnp
from jax.experimental import pallas as pl
from jax.experimental.pallas import tpu as pltpu


def _round_up(n, m):
    return ((n + m - 1) // m) * m


def _num_tensorcores():
    """Best-effort: 2 on v7x (2 TCs/chip), 1 on v5e/v6e."""
    try:
        dk = jax.devices()[0].device_kind.lower()
        return 2 if "v7" in dk else 1
    except Exception:
        return 1


def _mlp_kernel(n_layers, x_ref, *refs):
    """Fused MLP on one batch tile.

    refs = (w0, b0, w1, b1, ..., w_{L-1}, b_{L-1}, out_ref)
      w_i: (in_i_pad, out_i_pad) bf16 -- pre-transposed + zero-padded on host.
      b_i: (1, out_i_pad)        f32  -- last layer's padded lanes hold -1e30,
           so they vanish from the softmax normalizer (exp(-1e30 - m) == 0).
    """
    out_ref = refs[-1]
    param_refs = refs[:-1]

    h = x_ref[...]                                       # (TB, F) bf16
    for i in range(n_layers):
        w = param_refs[2 * i][...]                       # (in, out) bf16
        b = param_refs[2 * i + 1][...]                   # (1, out)  f32
        z = jnp.dot(h, w, preferred_element_type=jnp.float32) + b
        if i < n_layers - 1:
            # ReLU in f32 (safe on v5e's f32-only VPU); one cast for next MXU push.
            h = jnp.maximum(z, 0.0).astype(jnp.bfloat16)
        else:
            h = z                                        # logits, f32, lane-dense

    # Numerically stable log_softmax over the padded class dim. Padded lanes
    # carry -1e30 logits (from the padded bias) and contribute 0 to the sum.
    m = jnp.max(h, axis=1, keepdims=True)
    s = h - m
    lse = jnp.log(jnp.sum(jnp.exp(s), axis=1, keepdims=True))
    out_ref[...] = (s - lse).astype(out_ref.dtype)


def mlp_forward(x, params, *, block_batch=512, out_dtype=jnp.float32):
    """Run the fused MLP Pallas kernel.

    Args:
      x: (batch, features) float32
      params: list of (W, b) in PyTorch nn.Linear convention: W (out, in), b (out,)
      block_batch: max batch-tile rows (512-1024 recommended).
      out_dtype: output dtype (jnp.float32 exact log-probs; jnp.bfloat16 halves
        writeback bytes for inference/argmax use).
    Returns:
      (batch, n_classes) log-probabilities in out_dtype.
    """
    n_layers = len(params)
    batch, feat = x.shape
    n_classes = params[-1][0].shape[0]

    # Host-side layout plumbing: transpose to (in, out), zero-pad every layer's
    # out dim (and the next layer's in dim) to a lane-dense multiple of 128,
    # cast weights to bf16, keep biases f32. Last layer's padded bias lanes get
    # -1e30 so the in-kernel softmax needs no explicit mask.
    flat_params = []
    prev_out_pad = feat                                   # in-dim of layer 0 (unpadded)
    for i, (w, b) in enumerate(params):
        out_i, in_i = w.shape
        out_pad = _round_up(out_i, 128)
        wt = jnp.asarray(w, jnp.float32).T                # (in, out)
        wt = jnp.pad(wt, ((0, prev_out_pad - in_i), (0, out_pad - out_i)))
        bb = jnp.asarray(b, jnp.float32).reshape(1, -1)
        if i == n_layers - 1:
            bb = jnp.pad(bb, ((0, 0), (0, out_pad - out_i)),
                         constant_values=-1e30)
        else:
            bb = jnp.pad(bb, ((0, 0), (0, out_pad - out_i)))
        flat_params.append(wt.astype(jnp.bfloat16))
        flat_params.append(bb)
        prev_out_pad = out_pad
    c_pad = prev_out_pad                                  # padded class dim (>=128)

    # Batch tiling over a "parallel" grid axis. On v7x keep >=2 grid steps so
    # both TensorCores are used; on v5e/v6e prefer one big tile.
    tb = min(block_batch, _round_up(batch, 16))           # 16: bf16 sublane pack
    tb = max(16, (tb // 16) * 16)
    n_tc = _num_tensorcores()
    if n_tc > 1 and batch > 16:
        tb = min(tb, _round_up(max(1, pl.cdiv(batch, n_tc)), 16))
    b_pad = _round_up(batch, tb)
    grid = (b_pad // tb,)

    # bf16 input halves the dominant streamed HBM read.
    x_p = x.astype(jnp.bfloat16)
    if b_pad != batch:
        x_p = jnp.pad(x_p, ((0, b_pad - batch), (0, 0)))

    in_specs = [pl.BlockSpec((tb, feat), lambda i: (i, 0))]
    for p in flat_params:
        in_specs.append(pl.BlockSpec(p.shape, lambda i: (0, 0)))  # resident params
    out_spec = pl.BlockSpec((tb, c_pad), lambda i: (i, 0))        # lane-dense store

    flops = 2 * b_pad * sum(int(flat_params[2 * i].shape[0]) *
                            int(flat_params[2 * i].shape[1]) for i in range(n_layers))
    bytes_accessed = (x_p.size * x_p.dtype.itemsize
                      + sum(int(p.size) * p.dtype.itemsize for p in flat_params)
                      + b_pad * c_pad * jnp.dtype(out_dtype).itemsize)
    cost = pl.CostEstimate(flops=flops,
                           transcendentals=b_pad * c_pad,
                           bytes_accessed=bytes_accessed)

    kernel = functools.partial(_mlp_kernel, n_layers)
    out = pl.pallas_call(
        kernel,
        out_shape=jax.ShapeDtypeStruct((b_pad, c_pad), out_dtype),
        grid=grid,
        in_specs=in_specs,
        out_specs=out_spec,
        compiler_params=pltpu.CompilerParams(
            dimension_semantics=("parallel",)),
        cost_estimate=cost,
    )(x_p, *flat_params)
    return out[:batch, :n_classes]


def init_params(shape, key):
    """Deterministic synthetic parameters matching nn.Linear shapes/init."""
    params = []
    for i in range(len(shape) - 1):
        fan_in, fan_out = shape[i], shape[i + 1]
        key, kw, kb = jax.random.split(key, 3)
        bound = 1.0 / jnp.sqrt(fan_in)
        w = jax.random.uniform(kw, (fan_out, fan_in), jnp.float32, -bound, bound)
        b = jax.random.uniform(kb, (fan_out,), jnp.float32, -bound, bound)
        params.append((w, b))
    return params


def mlp_reference(x, params, *, bf16_matmul):
    """Pure-JAX reference of NeuralNetwork.forward (optionally bf16 matmul operands)."""
    h = x
    for i, (w, b) in enumerate(params):
        if bf16_matmul:
            h = jnp.dot(h.astype(jnp.bfloat16), w.T.astype(jnp.bfloat16),
                        preferred_element_type=jnp.float32) + b
        else:
            h = h @ w.T + b
        if i < len(params) - 1:
            h = jnp.maximum(h, 0.0)
    return jax.nn.log_softmax(h, axis=1)


if __name__ == "__main__":
    # shape = [features, hidden..., classes]; batch sized to exercise the grid.
    shape = [64, 32, 32, 10]
    batch = 1024

    key = jax.random.PRNGKey(0)
    key, kx = jax.random.split(key)
    x = jax.random.normal(kx, (batch, shape[0]), jnp.float32)
    params = init_params(shape, key)

    out = jax.block_until_ready(mlp_forward(x, params))
    assert out.shape == (batch, shape[-1])

    # Tight check vs. a bf16-operand reference (same numerics as the kernel).
    ref_bf16 = mlp_reference(x, params, bf16_matmul=True)
    assert jnp.allclose(out, ref_bf16, atol=1e-2, rtol=1e-2), "mismatch vs bf16 reference"
    # Looser sanity check vs. the full-f32 reference (bf16 matmul rounding).
    ref_f32 = mlp_reference(x, params, bf16_matmul=False)
    assert jnp.allclose(out, ref_f32, atol=1e-1, rtol=0.0), "mismatch vs f32 reference"
    # Rows are valid log-probabilities.
    assert jnp.allclose(jnp.sum(jnp.exp(out), axis=1), 1.0, atol=1e-3)

    print("KERNEL_OK")
</pallas_src>

<mosaic_0001>
module attributes {stable_mosaic.version = 11 : i64} {
  func.func @_mlp_kernel(%arg0: i32, %arg1: memref<512x64xbf16, #tpu.memory_space<vmem>>, %arg2: memref<64x128xbf16, #tpu.memory_space<vmem>>, %arg3: memref<1x128xf32, #tpu.memory_space<vmem>>, %arg4: memref<128x128xbf16, #tpu.memory_space<vmem>>, %arg5: memref<1x128xf32, #tpu.memory_space<vmem>>, %arg6: memref<128x128xbf16, #tpu.memory_space<vmem>>, %arg7: memref<1x128xf32, #tpu.memory_space<vmem>>, %arg8: memref<512x128xf32, #tpu.memory_space<vmem>>) attributes {dimension_semantics = [#tpu.dimension_semantics<parallel>], iteration_bounds = array<i64: 2>, scalar_prefetch = 0 : i64, scratch_operands = 0 : i64, tpu.core_type = #tpu.core_type<tc>, window_params = [{transform_indices = @transform_0, window_bounds = array<i64: 512, 64>}, {pipeline_mode = #tpu.pipeline_mode<synchronous>, transform_indices = @transform_1, window_bounds = array<i64: 64, 128>}, {pipeline_mode = #tpu.pipeline_mode<synchronous>, transform_indices = @transform_2, window_bounds = array<i64: 1, 128>}, {pipeline_mode = #tpu.pipeline_mode<synchronous>, transform_indices = @transform_3, window_bounds = array<i64: 128, 128>}, {pipeline_mode = #tpu.pipeline_mode<synchronous>, transform_indices = @transform_4, window_bounds = array<i64: 1, 128>}, {pipeline_mode = #tpu.pipeline_mode<synchronous>, transform_indices = @transform_5, window_bounds = array<i64: 128, 128>}, {pipeline_mode = #tpu.pipeline_mode<synchronous>, transform_indices = @transform_6, window_bounds = array<i64: 1, 128>}, {transform_indices = @transform_7, window_bounds = array<i64: 512, 128>}]} {
    %c0 = arith.constant 0 : index
    %c0_0 = arith.constant 0 : index
    %0 = vector.load %arg1[%c0, %c0_0] : memref<512x64xbf16, #tpu.memory_space<vmem>>, vector<512x64xbf16>
    %c0_1 = arith.constant 0 : index
    %c0_2 = arith.constant 0 : index
    %1 = vector.load %arg2[%c0_1, %c0_2] : memref<64x128xbf16, #tpu.memory_space<vmem>>, vector<64x128xbf16>
    %c0_3 = arith.constant 0 : index
    %c0_4 = arith.constant 0 : index
    %2 = vector.load %arg3[%c0_3, %c0_4] : memref<1x128xf32, #tpu.memory_space<vmem>>, vector<1x128xf32>
    %cst = arith.constant dense<0.000000e+00> : vector<512x128xf32>
    %3 = tpu.matmul %0, %1, %cst {dimension_numbers = #tpu.dot_dimension_numbers<[1], [0], [0], [1], [0, 0, 1, 1], [], []>} : vector<512x64xbf16>, vector<64x128xbf16>, vector<512x128xf32> -> vector<512x128xf32>
    %4 = vector.broadcast %2 : vector<1x128xf32> to vector<512x128xf32>
    %5 = arith.addf %3, %4 : vector<512x128xf32>
    %cst_5 = arith.constant 0.000000e+00 : f32
    %6 = vector.broadcast %cst_5 : f32 to vector<512x128xf32>
    %7 = arith.maximumf %5, %6 : vector<512x128xf32>
    %8 = arith.truncf %7 : vector<512x128xf32> to vector<512x128xbf16>
    %c0_6 = arith.constant 0 : index
    %c0_7 = arith.constant 0 : index
    %9 = vector.load %arg4[%c0_6, %c0_7] : memref<128x128xbf16, #tpu.memory_space<vmem>>, vector<128x128xbf16>
    %c0_8 = arith.constant 0 : index
    %c0_9 = arith.constant 0 : index
    %10 = vector.load %arg5[%c0_8, %c0_9] : memref<1x128xf32, #tpu.memory_space<vmem>>, vector<1x128xf32>
    %cst_10 = arith.constant dense<0.000000e+00> : vector<512x128xf32>
    %11 = tpu.matmul %8, %9, %cst_10 {dimension_numbers = #tpu.dot_dimension_numbers<[1], [0], [0], [1], [0, 0, 1, 1], [], []>} : vector<512x128xbf16>, vector<128x128xbf16>, vector<512x128xf32> -> vector<512x128xf32>
    %12 = vector.broadcast %10 : vector<1x128xf32> to vector<512x128xf32>
    %13 = arith.addf %11, %12 : vector<512x128xf32>
    %cst_11 = arith.constant 0.000000e+00 : f32
    %14 = vector.broadcast %cst_11 : f32 to vector<512x128xf32>
    %15 = arith.maximumf %13, %14 : vector<512x128xf32>
    %16 = arith.truncf %15 : vector<512x128xf32> to vector<512x128xbf16>
    %c0_12 = arith.constant 0 : index
    %c0_13 = arith.constant 0 : index
    %17 = vector.load %arg6[%c0_12, %c0_13] : memref<128x128xbf16, #tpu.memory_space<vmem>>, vector<128x128xbf16>
    %c0_14 = arith.constant 0 : index
    %c0_15 = arith.constant 0 : index
    %18 = vector.load %arg7[%c0_14, %c0_15] : memref<1x128xf32, #tpu.memory_space<vmem>>, vector<1x128xf32>
    %cst_16 = arith.constant dense<0.000000e+00> : vector<512x128xf32>
    %19 = tpu.matmul %16, %17, %cst_16 {dimension_numbers = #tpu.dot_dimension_numbers<[1], [0], [0], [1], [0, 0, 1, 1], [], []>} : vector<512x128xbf16>, vector<128x128xbf16>, vector<512x128xf32> -> vector<512x128xf32>
    %20 = vector.broadcast %18 : vector<1x128xf32> to vector<512x128xf32>
    %21 = arith.addf %19, %20 : vector<512x128xf32>
    %cst_17 = arith.constant dense<0xFF800000> : vector<512xf32>
    %22 = vector.multi_reduction <maximumf>, %21, %cst_17 [1] : vector<512x128xf32> to vector<512xf32>
    %23 = vector.shape_cast %22 : vector<512xf32> to vector<512x1xf32>
    %24 = vector.broadcast %23 : vector<512x1xf32> to vector<512x128xf32>
    %25 = arith.subf %21, %24 : vector<512x128xf32>
    %26 = math.exp %25 : vector<512x128xf32>
    %cst_18 = arith.constant dense<0.000000e+00> : vector<512xf32>
    %27 = vector.multi_reduction <add>, %26, %cst_18 [1] : vector<512x128xf32> to vector<512xf32>
    %28 = vector.shape_cast %27 : vector<512xf32> to vector<512x1xf32>
    %29 = math.log %28 : vector<512x1xf32>
    %30 = vector.broadcast %29 : vector<512x1xf32> to vector<512x128xf32>
    %31 = arith.subf %25, %30 : vector<512x128xf32>
    %c0_19 = arith.constant 0 : index
    %c0_20 = arith.constant 0 : index
    %32 = vector.load %arg8[%c0_19, %c0_20] : memref<512x128xf32, #tpu.memory_space<vmem>>, vector<512x128xf32>
    tpu.vector_store %arg8[%c0_19, %c0_20], %31 {strides = array<i32>} : memref<512x128xf32, #tpu.memory_space<vmem>>, vector<512x128xf32>,
    return
  }
  func.func @transform_0(%arg0: i32) -> (i32, i32) {
    %c0_i32 = arith.constant 0 : i32
    %c0_i32_0 = arith.constant 0 : i32
    return %arg0, %c0_i32 : i32, i32
  }
  func.func @transform_1(%arg0: i32) -> (i32, i32) {
    %c0_i32 = arith.constant 0 : i32
    %c0_i32_0 = arith.constant 0 : i32
    %c0_i32_1 = arith.constant 0 : i32
    return %c0_i32, %c0_i32_0 : i32, i32
  }
  func.func @transform_2(%arg0: i32) -> (i32, i32) {
    %c0_i32 = arith.constant 0 : i32
    %c0_i32_0 = arith.constant 0 : i32
    %c0_i32_1 = arith.constant 0 : i32
    return %c0_i32, %c0_i32_0 : i32, i32
  }
  func.func @transform_3(%arg0: i32) -> (i32, i32) {
    %c0_i32 = arith.constant 0 : i32
    %c0_i32_0 = arith.constant 0 : i32
    %c0_i32_1 = arith.constant 0 : i32
    return %c0_i32, %c0_i32_0 : i32, i32
  }
  func.func @transform_4(%arg0: i32) -> (i32, i32) {
    %c0_i32 = arith.constant 0 : i32
    %c0_i32_0 = arith.constant 0 : i32
    %c0_i32_1 = arith.constant 0 : i32
    return %c0_i32, %c0_i32_0 : i32, i32
  }
  func.func @transform_5(%arg0: i32) -> (i32, i32) {
    %c0_i32 = arith.constant 0 : i32
    %c0_i32_0 = arith.constant 0 : i32
    %c0_i32_1 = arith.constant 0 : i32
    return %c0_i32, %c0_i32_0 : i32, i32
  }
  func.func @transform_6(%arg0: i32) -> (i32, i32) {
    %c0_i32 = arith.constant 0 : i32
    %c0_i32_0 = arith.constant 0 : i32
    %c0_i32_1 = arith.constant 0 : i32
    return %c0_i32, %c0_i32_0 : i32, i32
  }
  func.func @transform_7(%arg0: i32) -> (i32, i32) {
    %c0_i32 = arith.constant 0 : i32
    %c0_i32_0 = arith.constant 0 : i32
    return %arg0, %c0_i32 : i32, i32
  }
}

</mosaic_0001>

<llo_original>
// kernel: tpu_custom_call.1
$region0: #{tpu_custom_call.1}
  #allocation0 [shape = 'u32[]', space=smem, size = 0x4, offset = 0x4, fixed_abs, tag = 'smem constant byte address 0x4 - core index']
  #allocation1 [shape = 'u32[144,128]{1,0:T(1,128)}', space=vmem, size = 0x12000, scoped, tag = 'internal scratch']
  %s0 = inlined_call_operand.vmem [shape: bf16[1024,64], index: 0, kind: input, shape index: {}]
  %s1 = inlined_call_operand.vmem [shape: bf16[64,128], index: 1, kind: input, shape index: {}]
  %s2 = inlined_call_operand.vmem [shape: f32[1,128], index: 2, kind: input, shape index: {}]
  %s3 = inlined_call_operand.vmem [shape: bf16[128,128], index: 3, kind: input, shape index: {}]
  %s4 = inlined_call_operand.vmem [shape: f32[1,128], index: 4, kind: input, shape index: {}]
  %s5 = inlined_call_operand.vmem [shape: bf16[128,128], index: 5, kind: input, shape index: {}]
  %s6 = inlined_call_operand.vmem [shape: f32[1,128], index: 6, kind: input, shape index: {}]
  %s7 = inlined_call_operand.hbm [shape: f32[1024,128], index: 7, kind: output, shape index: {}]
  %s8 = sld [smem:[#allocation0]]
  $region61: #{tpu_custom_call.1} parent=0
    _
  %s10 = ssub.s32 1, %s8
  %s11 = scalar_select 0, %s10, %s8
  $region1: #{tpu_custom_call.1} parent=0
    #allocation2 [shape = 'u8[524288]{0}', space=vmem, size = 0x80000, scoped, tag = 'output window, operand 0']
    #allocation3 [shape = 's32[2]{0}', space=sflag, size = 0x8, scoped, tag = 'scoped memory for tpu_custom_call.1']
    %12 = vsyncpa [#allocation3], 0
    %s13 = scalar_lea.sflag [#allocation3], 1
    %14 = vsyncpa %s13, 0
    loop: start=0, step=1, limit=4
    $region2: #{tpu_custom_call.1} parent=1 // loop_pre_header
      _
    $region3: #{tpu_custom_call.1} parent=1 // loop_header
      %s16 = sphi 0, %s20
      %p17 = scmp.ge.s32.totalorder %s16, 4
      %s26 = sphi 0, %s28
      %s29 = sphi 0, %s26
      %s30 = sphi 0, %s29
      %s46 = sphi 0, %s30
      %s50 = sphi 0, %s50
      %s52 = sphi 0, %s50
      %s53 = sphi 0, %s52
      %s67 = sphi 0, %s53
      %s71 = sphi 0, %s71
      %s73 = sphi 0, %s71
      %s74 = sphi 0, %s73
      %s88 = sphi 0, %s74
      %s92 = sphi 0, %s92
      %s94 = sphi 0, %s92
      %s95 = sphi 0, %s94
      %s109 = sphi 0, %s95
      %s113 = sphi 0, %s113
      %s115 = sphi 0, %s113
      %s116 = sphi 0, %s115
      %s130 = sphi 0, %s116
      %s134 = sphi 0, %s134
      %s136 = sphi 0, %s134
      %s137 = sphi 0, %s136
      %s151 = sphi 0, %s137
      %s155 = sphi 0, %s155
      %s157 = sphi 0, %s155
      %s158 = sphi 0, %s157
      %s172 = sphi 0, %s158
      %s178 = sphi 0, %s180
      %s181 = sphi 0, %s178
      %s182 = sphi 0, %s181
      %s198 = sphi 0, %s182
    $region4: #{tpu_custom_call.1} parent=1 // loop_header_branch
      %19 = sbr.rel (%p17) target = $region8
    $region5: #{tpu_custom_call.1} parent=1 // loop_body
      %s21 = ssub.s32 %s16, 1
      %s22 = ssub.s32 %s16, 2
      %s23 = sadd.s32 %s16, 1
      %s24 = ssub.s32 %s16, %s23
      %p25 = scmp.eq.s32.totalorder %s24, 0
      %s27 = sadd.s32 %s26, 1
      %s28 = scalar_select %p25, %s26, %s27
      %p31 = pneg %p25
      %p32 = scmp.eq.s32.totalorder %s16, 1
      %p33 = por %p31, %p32
      %p34 = scmp.ne.s32.totalorder %s26, %s29
      %p35 = scmp.eq.s32.totalorder %s16, 0
      %p36 = por %p34, %p35
      %p37 = scmp.ne.s32.totalorder %s26, %s29
      %p38 = scmp.eq.s32.totalorder %s21, 1
      %p39 = por %p37, %p38
      %p40 = scmp.ne.s32.totalorder %s29, %s30
      %p41 = scmp.eq.s32.totalorder %s21, 0
      %p42 = por %p40, %p41
      %p43 = scmp.ne.s32.totalorder %s29, %s30
      %p44 = scmp.eq.s32.totalorder %s22, 1
      %p45 = por %p43, %p44
      %p47 = scmp.ne.s32.totalorder %s30, %s46
      %p48 = scmp.eq.s32.totalorder %s22, 0
      %p49 = por %p47, %p48
      %s51 = sadd.s32 %s50, 1
      %p54 = scmp.eq.s32.totalorder %s16, 1
      %p55 = scmp.ne.s32.totalorder %s50, %s52
      %p56 = scmp.eq.s32.totalorder %s16, 0
      %p57 = por %p55, %p56
      %p58 = scmp.ne.s32.totalorder %s50, %s52
      %p59 = scmp.eq.s32.totalorder %s21, 1
      %p60 = por %p58, %p59
      %p61 = scmp.ne.s32.totalorder %s52, %s53
      %p62 = scmp.eq.s32.totalorder %s21, 0
      %p63 = por %p61, %p62
      %p64 = scmp.ne.s32.totalorder %s52, %s53
      %p65 = scmp.eq.s32.totalorder %s22, 1
      %p66 = por %p64, %p65
      %p68 = scmp.ne.s32.totalorder %s53, %s67
      %p69 = scmp.eq.s32.totalorder %s22, 0
      %p70 = por %p68, %p69
      %s72 = sadd.s32 %s71, 1
      %p75 = scmp.eq.s32.totalorder %s16, 1
      %p76 = scmp.ne.s32.totalorder %s71, %s73
      %p77 = scmp.eq.s32.totalorder %s16, 0
      %p78 = por %p76, %p77
      %p79 = scmp.ne.s32.totalorder %s71, %s73
      %p80 = scmp.eq.s32.totalorder %s21, 1
      %p81 = por %p79, %p80
      %p82 = scmp.ne.s32.totalorder %s73, %s74
      %p83 = scmp.eq.s32.totalorder %s21, 0
      %p84 = por %p82, %p83
      %p85 = scmp.ne.s32.totalorder %s73, %s74
      %p86 = scmp.eq.s32.totalorder %s22, 1
      %p87 = por %p85, %p86
      %p89 = scmp.ne.s32.totalorder %s74, %s88
      %p90 = scmp.eq.s32.totalorder %s22, 0
      %p91 = por %p89, %p90
      %s93 = sadd.s32 %s92, 1
      %p96 = scmp.eq.s32.totalorder %s16, 1
      %p97 = scmp.ne.s32.totalorder %s92, %s94
      %p98 = scmp.eq.s32.totalorder %s16, 0
      %p99 = por %p97, %p98
      %p100 = scmp.ne.s32.totalorder %s92, %s94
      %p101 = scmp.eq.s32.totalorder %s21, 1
      %p102 = por %p100, %p101
      %p103 = scmp.ne.s32.totalorder %s94, %s95
      %p104 = scmp.eq.s32.totalorder %s21, 0
      %p105 = por %p103, %p104
      %p106 = scmp.ne.s32.totalorder %s94, %s95
      %p107 = scmp.eq.s32.totalorder %s22, 1
      %p108 = por %p106, %p107
      %p110 = scmp.ne.s32.totalorder %s95, %s109
      %p111 = scmp.eq.s32.totalorder %s22, 0
      %p112 = por %p110, %p111
      %s114 = sadd.s32 %s113, 1
      %p117 = scmp.eq.s32.totalorder %s16, 1
      %p118 = scmp.ne.s32.totalorder %s113, %s115
      %p119 = scmp.eq.s32.totalorder %s16, 0
      %p120 = por %p118, %p119
      %p121 = scmp.ne.s32.totalorder %s113, %s115
      %p122 = scmp.eq.s32.totalorder %s21, 1
      %p123 = por %p121, %p122
      %p124 = scmp.ne.s32.totalorder %s115, %s116
      %p125 = scmp.eq.s32.totalorder %s21, 0
      %p126 = por %p124, %p125
      %p127 = scmp.ne.s32.totalorder %s115, %s116
      %p128 = scmp.eq.s32.totalorder %s22, 1
      %p129 = por %p127, %p128
      %p131 = scmp.ne.s32.totalorder %s116, %s130
      %p132 = scmp.eq.s32.totalorder %s22, 0
      %p133 = por %p131, %p132
      %s135 = sadd.s32 %s134, 1
      %p138 = scmp.eq.s32.totalorder %s16, 1
      %p139 = scmp.ne.s32.totalorder %s134, %s136
      %p140 = scmp.eq.s32.totalorder %s16, 0
      %p141 = por %p139, %p140
      %p142 = scmp.ne.s32.totalorder %s134, %s136
      %p143 = scmp.eq.s32.totalorder %s21, 1
      %p144 = por %p142, %p143
      %p145 = scmp.ne.s32.totalorder %s136, %s137
      %p146 = scmp.eq.s32.totalorder %s21, 0
      %p147 = por %p145, %p146
      %p148 = scmp.ne.s32.totalorder %s136, %s137
      %p149 = scmp.eq.s32.totalorder %s22, 1
      %p150 = por %p148, %p149
      %p152 = scmp.ne.s32.totalorder %s137, %s151
      %p153 = scmp.eq.s32.totalorder %s22, 0
      %p154 = por %p152, %p153
      %s156 = sadd.s32 %s155, 1
      %p159 = scmp.eq.s32.totalorder %s16, 1
      %p160 = scmp.ne.s32.totalorder %s155, %s157
      %p161 = scmp.eq.s32.totalorder %s16, 0
      %p162 = por %p160, %p161
      %p163 = scmp.ne.s32.totalorder %s155, %s157
      %p164 = scmp.eq.s32.totalorder %s21, 1
      %p165 = por %p163, %p164
      %p166 = scmp.ne.s32.totalorder %s157, %s158
      %p167 = scmp.eq.s32.totalorder %s21, 0
      %p168 = por %p166, %p167
      %p169 = scmp.ne.s32.totalorder %s157, %s158
      %p170 = scmp.eq.s32.totalorder %s22, 1
      %p171 = por %p169, %p170
      %p173 = scmp.ne.s32.totalorder %s158, %s172
      %p174 = scmp.eq.s32.totalorder %s22, 0
      %p175 = por %p173, %p174
      %s176 = ssub.s32 %s16, %s23
      %p177 = scmp.eq.s32.totalorder %s176, 0
      %s179 = sadd.s32 %s178, 1
      %s180 = scalar_select %p177, %s178, %s179
      %p183 = pneg %p177
      %p184 = scmp.eq.s32.totalorder %s16, 1
      %p185 = por %p183, %p184
      %p186 = scmp.ne.s32.totalorder %s178, %s181
      %p187 = scmp.eq.s32.totalorder %s16, 0
      %p188 = por %p186, %p187
      %p189 = scmp.ne.s32.totalorder %s178, %s181
      %p190 = scmp.eq.s32.totalorder %s21, 1
      %p191 = por %p189, %p190
      %p192 = scmp.ne.s32.totalorder %s181, %s182
      %p193 = scmp.eq.s32.totalorder %s21, 0
      %p194 = por %p192, %p193
      %p195 = scmp.ne.s32.totalorder %s181, %s182
      %p196 = scmp.eq.s32.totalorder %s22, 1
      %p197 = por %p195, %p196
      %p199 = scmp.ne.s32.totalorder %s182, %s198
      %p200 = scmp.eq.s32.totalorder %s22, 0
      %p201 = por %p199, %p200
      %p202 = scmp.le.s32.totalorder 1, %s16
      %p203 = scmp.lt.s32.totalorder %s16, 3
      %p204 = pnand %p202, %p203
      %p205 = pneg %p204
      // Predicated region
      $region9: #{tpu_custom_call.1} parent=5 // pred_check
        _
      $region10: #{tpu_custom_call.1} parent=5 // pred_check_branch
        %207 = sbr.rel (%p204) target = $region12
      $region11: #{tpu_custom_call.1} parent=5 // pred_region
        %s208 = ssub.s32 %s16, 1
        // Predicated region
        $region13: #{tpu_custom_call.1} parent=11 // pred_check
          %p209 = pneg %p63
        $region14: #{tpu_custom_call.1} parent=11 // pred_check_branch
          %211 = sbr.rel (%p209) target = $region16
        $region15: #{tpu_custom_call.1} parent=11 // pred_region
          _
        $region16: #{tpu_custom_call.1} parent=11 // pred_fallthru
          _
        // Predicated region
        $region17: #{tpu_custom_call.1} parent=11 // pred_check
          %p212 = pneg %p84
        $region18: #{tpu_custom_call.1} parent=11 // pred_check_branch
          %214 = sbr.rel (%p212) target = $region20
        $region19: #{tpu_custom_call.1} parent=11 // pred_region
          _
        $region20: #{tpu_custom_call.1} parent=11 // pred_fallthru
          _
        // Predicated region
        $region21: #{tpu_custom_call.1} parent=11 // pred_check
          %p215 = pneg %p105
        $region22: #{tpu_custom_call.1} parent=11 // pred_check_branch
          %217 = sbr.rel (%p215) target = $region24
        $region23: #{tpu_custom_call.1} parent=11 // pred_region
          _
        $region24: #{tpu_custom_call.1} parent=11 // pred_fallthru
          _
        // Predicated region
        $region25: #{tpu_custom_call.1} parent=11 // pred_check
          %p218 = pneg %p126
        $region26: #{tpu_custom_call.1} parent=11 // pred_check_branch
          %220 = sbr.rel (%p218) target = $region28
        $region27: #{tpu_custom_call.1} parent=11 // pred_region
          _
        $region28: #{tpu_custom_call.1} parent=11 // pred_fallthru
          _
        // Predicated region
        $region29: #{tpu_custom_call.1} parent=11 // pred_check
          %p221 = pneg %p147
        $region30: #{tpu_custom_call.1} parent=11 // pred_check_branch
          %223 = sbr.rel (%p221) target = $region32
        $region31: #{tpu_custom_call.1} parent=11 // pred_region
          _
        $region32: #{tpu_custom_call.1} parent=11 // pred_fallthru
          _
        // Predicated region
        $region33: #{tpu_custom_call.1} parent=11 // pred_check
          %p224 = pneg %p168
        $region34: #{tpu_custom_call.1} parent=11 // pred_check_branch
          %226 = sbr.rel (%p224) target = $region36
        $region35: #{tpu_custom_call.1} parent=11 // pred_region
          _
        $region36: #{tpu_custom_call.1} parent=11 // pred_fallthru
          _
      $region12: #{tpu_custom_call.1} parent=5 // pred_fallthru
        _
      %p227 = scmp.lt.s32.totalorder %s16, 2
      // Predicated region
      $region37: #{tpu_custom_call.1} parent=5 // pred_check
        %p228 = pneg %p227
      $region38: #{tpu_custom_call.1} parent=5 // pred_check_branch
        %230 = sbr.rel (%p228) target = $region40
      $region39: #{tpu_custom_call.1} parent=5 // pred_region
        // Predicated region
        $region41: #{tpu_custom_call.1} parent=39 // pred_check
          %p231 = pneg %p36
        $region42: #{tpu_custom_call.1} parent=39 // pred_check_branch
          %233 = sbr.rel (%p231) target = $region44
        $region43: #{tpu_custom_call.1} parent=39 // pred_region
          %s234 = smul.u32 64, %s16
          %p235 = scmp.lt.s32.totalorder %s234, 127
          %s236 = scalar_select %p235, %s234, 127
          %s237 = smul.addr %s236, 4
          %s238 = scalar_lea.vmem %s0, %s237
          %s239 = smul.u32 64, %s16
        $region44: #{tpu_custom_call.1} parent=39 // pred_fallthru
          _
      $region40: #{tpu_custom_call.1} parent=5 // pred_fallthru
        _
      %p240 = scmp.le.s32.totalorder 1, %s16
      %p241 = scmp.lt.s32.totalorder %s16, 3
      %p242 = pnand %p240, %p241
      %p243 = pneg %p242
      // Predicated region
      $region45: #{tpu_custom_call.1} parent=5 // pred_check
        _
      $region46: #{tpu_custom_call.1} parent=5 // pred_check_branch
        %245 = sbr.rel (%p242) target = $region48
      $region47: #{tpu_custom_call.1} parent=5 // pred_region
        %s246 = ssub.s32 %s16, 1
        %s247 = smul.u32 64, %s21
        %p248 = scmp.lt.s32.totalorder %s247, 127
        %s249 = scalar_select %p248, %s247, 127
        %s250 = smul.addr %s249, 4
        %s251 = scalar_lea.vmem %s0, %s250
        %p252 = pneg %p42
        %p253 = pneg %p39
        %p254 = pneg %p63
        %p255 = pneg %p60
        %p256 = pneg %p84
        %p257 = pneg %p81
        %p258 = pneg %p105
        %p259 = pneg %p102
        %p260 = pneg %p126
        %p261 = pneg %p123
        %p262 = pneg %p147
        %p263 = pneg %p144
        %p264 = pneg %p168
        %p265 = pneg %p165
        %p266 = pneg %p194
        %p267 = pneg %p191
        %s268 = sand.u32 %s181, 1
        %s269 = scalar_lea.sflag [#allocation3], %s268
        %s270 = sand.u32 %s181, 1
        %s271 = smul.addr %s270, 512
        %s272 = scalar_lea.vmem [#allocation2], %s271
        %s273 = smul.u32 64, %s21
        %p274 = scmp.lt.s32.totalorder %s273, 127
        %s275 = scalar_select %p274, %s273, 127
        %s276 = smul.addr %s275, 4
        %s277 = scalar_lea.vmem %s0, %s276
        %s278 = smul.u32 64, %s21
        %s279 = smul.u32 64, %s21
        %v281 = vld [vmem:[%s277] sm:$0xf]
        %v282 = vld [vmem:[%s277 + $0x4] sm:$0xf]
        %v283 = vld [vmem:[%s277 + $0x8] sm:$0xf]
        %v284 = vld [vmem:[%s277 + $0xc] sm:$0xf]
        %v285 = vld [vmem:[%s277 + $0x10] sm:$0xf]
        %v286 = vld [vmem:[%s277 + $0x14] sm:$0xf]
        %v287 = vld [vmem:[%s277 + $0x18] sm:$0xf]
        %v288 = vld [vmem:[%s277 + $0x1c] sm:$0xf]
        %v289 = vld [vmem:[%s277 + $0x20] sm:$0xf]
        %v290 = vld [vmem:[%s277 + $0x24] sm:$0xf]
        %v291 = vld [vmem:[%s277 + $0x28] sm:$0xf]
        %v292 = vld [vmem:[%s277 + $0x2c] sm:$0xf]
        %v293 = vld [vmem:[%s277 + $0x30] sm:$0xf]
        %v294 = vld [vmem:[%s277 + $0x34] sm:$0xf]
        %v295 = vld [vmem:[%s277 + $0x38] sm:$0xf]
        %v296 = vld [vmem:[%s277 + $0x3c] sm:$0xf]
        %v297 = vld [vmem:[%s277 + $0x40] sm:$0xf]
        %v298 = vld [vmem:[%s277 + $0x44] sm:$0xf]
        %v299 = vld [vmem:[%s277 + $0x48] sm:$0xf]
        %v300 = vld [vmem:[%s277 + $0x4c] sm:$0xf]
        %v301 = vld [vmem:[%s277 + $0x50] sm:$0xf]
        %v302 = vld [vmem:[%s277 + $0x54] sm:$0xf]
        %v303 = vld [vmem:[%s277 + $0x58] sm:$0xf]
        %v304 = vld [vmem:[%s277 + $0x5c] sm:$0xf]
        %v305 = vld [vmem:[%s277 + $0x60] sm:$0xf]
        %v306 = vld [vmem:[%s277 + $0x64] sm:$0xf]
        %v307 = vld [vmem:[%s277 + $0x68] sm:$0xf]
        %v308 = vld [vmem:[%s277 + $0x6c] sm:$0xf]
        %v309 = vld [vmem:[%s277 + $0x70] sm:$0xf]
        %v310 = vld [vmem:[%s277 + $0x74] sm:$0xf]
        %v311 = vld [vmem:[%s277 + $0x78] sm:$0xf]
        %v312 = vld [vmem:[%s277 + $0x7c] sm:$0xf]
        %v313 = vld [vmem:[%s277 + $0x80] sm:$0xf]
        %v314 = vld [vmem:[%s277 + $0x84] sm:$0xf]
        %v315 = vld [vmem:[%s277 + $0x88] sm:$0xf]
        %v316 = vld [vmem:[%s277 + $0x8c] sm:$0xf]
        %v317 = vld [vmem:[%s277 + $0x90] sm:$0xf]
        %v318 = vld [vmem:[%s277 + $0x94] sm:$0xf]
        %v319 = vld [vmem:[%s277 + $0x98] sm:$0xf]
        %v320 = vld [vmem:[%s277 + $0x9c] sm:$0xf]
        %v321 = vld [vmem:[%s277 + $0xa0] sm:$0xf]
        %v322 = vld [vmem:[%s277 + $0xa4] sm:$0xf]
        %v323 = vld [vmem:[%s277 + $0xa8] sm:$0xf]
        %v324 = vld [vmem:[%s277 + $0xac] sm:$0xf]
        %v325 = vld [vmem:[%s277 + $0xb0] sm:$0xf]
        %v326 = vld [vmem:[%s277 + $0xb4] sm:$0xf]
        %v327 = vld [vmem:[%s277 + $0xb8] sm:$0xf]
        %v328 = vld [vmem:[%s277 + $0xbc] sm:$0xf]
        %v329 = vld [vmem:[%s277 + $0xc0] sm:$0xf]
        %v330 = vld [vmem:[%s277 + $0xc4] sm:$0xf]
        %v331 = vld [vmem:[%s277 + $0xc8] sm:$0xf]
        %v332 = vld [vmem:[%s277 + $0xcc] sm:$0xf]
        %v333 = vld [vmem:[%s277 + $0xd0] sm:$0xf]
        %v334 = vld [vmem:[%s277 + $0xd4] sm:$0xf]
        %v335 = vld [vmem:[%s277 + $0xd8] sm:$0xf]
        %v336 = vld [vmem:[%s277 + $0xdc] sm:$0xf]
        %v337 = vld [vmem:[%s277 + $0xe0] sm:$0xf]
        %v338 = vld [vmem:[%s277 + $0xe4] sm:$0xf]
        %v339 = vld [vmem:[%s277 + $0xe8] sm:$0xf]
        %v340 = vld [vmem:[%s277 + $0xec] sm:$0xf]
        %v341 = vld [vmem:[%s277 + $0xf0] sm:$0xf]
        %v342 = vld [vmem:[%s277 + $0xf4] sm:$0xf]
        %v343 = vld [vmem:[%s277 + $0xf8] sm:$0xf]
        %v344 = vld [vmem:[%s277 + $0xfc] sm:$0xf]
        %v345 = vld [vmem:[%s1] sm:$0xf]
        %v346 = vld [vmem:[%s1 + $0x4] sm:$0xf]
        %v347 = vld [vmem:[%s1 + $0x8] sm:$0xf]
        %v348 = vld [vmem:[%s1 + $0xc] sm:$0xf]
        %v349 = vld [vmem:[%s1 + $0x10] sm:$0xf]
        %v350 = vld [vmem:[%s1 + $0x14] sm:$0xf]
        %v351 = vld [vmem:[%s1 + $0x18] sm:$0xf]
        %v352 = vld [vmem:[%s1 + $0x1c] sm:$0xf]
        %v353 = vld [vmem:[%s2] sm:$0x1]
        %v355 = vlaneseq
        %v356 = vshrl.u32 %v355, 7
        %v357 = vsub.s32 0, %v356
        %v358 = vrot.slane %v353, %v357
        %v424 = vunpack.c.l.b16 %v281
        %v425 = vunpack.c.l.b16 %v282
        %v426 = vunpack.c.l.b16 %v283
        %v427 = vunpack.c.l.b16 %v284
        %v428 = vunpack.c.l.b16 %v285
        %v429 = vunpack.c.l.b16 %v286
        %v430 = vunpack.c.l.b16 %v287
        %v431 = vunpack.c.l.b16 %v288
        %v432 = vunpack.c.l.b16 %v289
        %v433 = vunpack.c.l.b16 %v290
        %v434 = vunpack.c.l.b16 %v291
        %v435 = vunpack.c.l.b16 %v292
        %v436 = vunpack.c.l.b16 %v293
        %v437 = vunpack.c.l.b16 %v294
        %v438 = vunpack.c.l.b16 %v295
        %v439 = vunpack.c.l.b16 %v296
        %v440 = vunpack.c.l.b16 %v297
        %v441 = vunpack.c.l.b16 %v298
        %v442 = vunpack.c.l.b16 %v299
        %v443 = vunpack.c.l.b16 %v300
        %v444 = vunpack.c.l.b16 %v301
        %v445 = vunpack.c.l.b16 %v302
        %v446 = vunpack.c.l.b16 %v303
        %v447 = vunpack.c.l.b16 %v304
        %v448 = vunpack.c.l.b16 %v305
        %v449 = vunpack.c.l.b16 %v306
        %v450 = vunpack.c.l.b16 %v307
        %v451 = vunpack.c.l.b16 %v308
        %v452 = vunpack.c.l.b16 %v309
        %v453 = vunpack.c.l.b16 %v310
        %v454 = vunpack.c.l.b16 %v311
        %v455 = vunpack.c.l.b16 %v312
        %v456 = vunpack.c.l.b16 %v313
        %v457 = vunpack.c.l.b16 %v314
        %v458 = vunpack.c.l.b16 %v315
        %v459 = vunpack.c.l.b16 %v316
        %v460 = vunpack.c.l.b16 %v317
        %v461 = vunpack.c.l.b16 %v318
        %v462 = vunpack.c.l.b16 %v319
        %v463 = vunpack.c.l.b16 %v320
        %v464 = vunpack.c.l.b16 %v321
        %v465 = vunpack.c.l.b16 %v322
        %v466 = vunpack.c.l.b16 %v323
        %v467 = vunpack.c.l.b16 %v324
        %v468 = vunpack.c.l.b16 %v325
        %v469 = vunpack.c.l.b16 %v326
        %v470 = vunpack.c.l.b16 %v327
        %v471 = vunpack.c.l.b16 %v328
        %v472 = vunpack.c.l.b16 %v329
        %v473 = vunpack.c.l.b16 %v330
        %v474 = vunpack.c.l.b16 %v331
        %v475 = vunpack.c.l.b16 %v332
        %v476 = vunpack.c.l.b16 %v333
        %v477 = vunpack.c.l.b16 %v334
        %v478 = vunpack.c.l.b16 %v335
        %v479 = vunpack.c.l.b16 %v336
        %v480 = vunpack.c.l.b16 %v337
        %v481 = vunpack.c.l.b16 %v338
        %v482 = vunpack.c.l.b16 %v339
        %v483 = vunpack.c.l.b16 %v340
        %v484 = vunpack.c.l.b16 %v341
        %v485 = vunpack.c.l.b16 %v342
        %v486 = vunpack.c.l.b16 %v343
        %v487 = vunpack.c.l.b16 %v344
        %v488 = vpack.c.b16 %v425, %v424
        %v489 = vpack.c.b16 %v427, %v426
        %v490 = vpack.c.b16 %v429, %v428
        %v491 = vpack.c.b16 %v431, %v430
        %v492 = vpack.c.b16 %v433, %v432
        %v493 = vpack.c.b16 %v435, %v434
        %v494 = vpack.c.b16 %v437, %v436
        %v495 = vpack.c.b16 %v439, %v438
        %v496 = vpack.c.b16 %v441, %v440
        %v497 = vpack.c.b16 %v443, %v442
        %v498 = vpack.c.b16 %v445, %v444
        %v499 = vpack.c.b16 %v447, %v446
        %v500 = vpack.c.b16 %v449, %v448
        %v501 = vpack.c.b16 %v451, %v450
        %v502 = vpack.c.b16 %v453, %v452
        %v503 = vpack.c.b16 %v455, %v454
        %v504 = vpack.c.b16 %v457, %v456
        %v505 = vpack.c.b16 %v459, %v458
        %v506 = vpack.c.b16 %v461, %v460
        %v507 = vpack.c.b16 %v463, %v462
        %v508 = vpack.c.b16 %v465, %v464
        %v509 = vpack.c.b16 %v467, %v466
        %v510 = vpack.c.b16 %v469, %v468
        %v511 = vpack.c.b16 %v471, %v470
        %v512 = vpack.c.b16 %v473, %v472
        %v513 = vpack.c.b16 %v475, %v474
        %v514 = vpack.c.b16 %v477, %v476
        %v515 = vpack.c.b16 %v479, %v478
        %v516 = vpack.c.b16 %v481, %v480
        %v517 = vpack.c.b16 %v483, %v482
        %v518 = vpack.c.b16 %v485, %v484
        %v519 = vpack.c.b16 %v487, %v486
        %v528 = vunpack.c.l.b16 %v345
        %v529 = vunpack.c.l.b16 %v346
        %v530 = vunpack.c.l.b16 %v347
        %v531 = vunpack.c.l.b16 %v348
        %v532 = vunpack.c.l.b16 %v349
        %v533 = vunpack.c.l.b16 %v350
        %v534 = vunpack.c.l.b16 %v351
        %v535 = vunpack.c.l.b16 %v352
        %v536 = vpack.c.b16 %v529, %v528
        %v537 = vpack.c.b16 %v531, %v530
        %v538 = vpack.c.b16 %v533, %v532
        %v539 = vpack.c.b16 %v535, %v534
        %vm544 = vcmask 523264
        %v546 = vsel %vm544, %v488, 0
        %v549 = vsel %vm544, %v489, 0
        %v552 = vsel %vm544, %v490, 0
        %v555 = vsel %vm544, %v491, 0
        %v558 = vsel %vm544, %v492, 0
        %v561 = vsel %vm544, %v493, 0
        %v564 = vsel %vm544, %v494, 0
        %v567 = vsel %vm544, %v495, 0
        %v570 = vsel %vm544, %v496, 0
        %v573 = vsel %vm544, %v497, 0
        %v576 = vsel %vm544, %v498, 0
        %v579 = vsel %vm544, %v499, 0
        %v582 = vsel %vm544, %v500, 0
        %v585 = vsel %vm544, %v501, 0
        %v588 = vsel %vm544, %v502, 0
        %v591 = vsel %vm544, %v503, 0
        %v594 = vsel %vm544, %v504, 0
        %v597 = vsel %vm544, %v505, 0
        %v600 = vsel %vm544, %v506, 0
        %v603 = vsel %vm544, %v507, 0
        %v606 = vsel %vm544, %v508, 0
        %v609 = vsel %vm544, %v509, 0
        %v612 = vsel %vm544, %v510, 0
        %v615 = vsel %vm544, %v511, 0
        %v618 = vsel %vm544, %v512, 0
        %v621 = vsel %vm544, %v513, 0
        %v624 = vsel %vm544, %v514, 0
        %v627 = vsel %vm544, %v515, 0
        %v630 = vsel %vm544, %v516, 0
        %v633 = vsel %vm544, %v517, 0
        %v636 = vsel %vm544, %v518, 0
        %v639 = vsel %vm544, %v519, 0
        %641 = vmatprep.subr.bf16.mxu0 0
        %642 = vmatpush1.bf16.msra.mxu0 %v536
        %643 = vmatprep.subr.bf16.mxu0 0
        %644 = vmatpush1.bf16.msra.mxu0 %v537
        %645 = vmatprep.subr.bf16.mxu0 0
        %646 = vmatpush1.bf16.msra.mxu0 %v538
        %647 = vmatprep.subr.bf16.mxu0 0
        %648 = vmatpush1.bf16.msra.mxu0 %v539
        %649 = vmatprep.subr.bf16.mxu0 0
        %650 = vmatpush1.bf16.msra.mxu0 0
        %651 = vmatprep.subr.bf16.mxu0 0
        %652 = vmatpush1.bf16.msra.mxu0 0
        %653 = vmatprep.subr.bf16.mxu0 0
        %654 = vmatpush1.bf16.msra.mxu0 0
        %655 = vmatprep.subr.bf16.mxu0 0
        %656 = vmatpush1.bf16.msra.mxu0 0
        %657 = vmatprep.subr.bf16.mxu0 0
        %658 = vmatpush1.bf16.msra.mxu0 0
        %659 = vmatprep.subr.bf16.mxu0 0
        %660 = vmatpush1.bf16.msra.mxu0 0
        %661 = vmatprep.subr.bf16.mxu0 0
        %662 = vmatpush1.bf16.msra.mxu0 0
        %663 = vmatprep.subr.bf16.mxu0 0
        %664 = vmatpush1.bf16.msra.mxu0 0
        %665 = vmatprep.subr.bf16.mxu0 0
        %666 = vmatpush1.bf16.msra.mxu0 0
        %667 = vmatprep.subr.bf16.mxu0 0
        %668 = vmatpush1.bf16.msra.mxu0 0
        %669 = vmatprep.subr.bf16.mxu0 0
        %670 = vmatpush1.bf16.msra.mxu0 0
        %671 = vmatprep.subr.bf16.mxu0 0
        %672 = vmatpush1.bf16.msra.mxu0 0
        %673 = vmatprep.mubr.bf16.mxu0 0
        %674 = vmatmul.mubr.bf16.gmra.mrb[0].mxu0 %v546
        %v675 = vpop.f32.mrb[0].mxu0
        %v676 = vadd.f32 %v358, %v675
        %v677 = vpop.f32.mrb[0].mxu0
        %v678 = vpop.f32.mrb[0].mxu0
        %v679 = vadd.f32 %v358, %v678
        %v680 = vpop.f32.mrb[0].mxu0
        %681 = vmatprep.mubr.bf16.mxu0 0
        %682 = vmatmul.mubr.bf16.gmra.mrb[0].mxu0 %v549
        %v683 = vpop.f32.mrb[0].mxu0
        %v684 = vadd.f32 %v358, %v683
        %v685 = vpop.f32.mrb[0].mxu0
        %v686 = vpop.f32.mrb[0].mxu0
        %v687 = vadd.f32 %v358, %v686
        %v688 = vpop.f32.mrb[0].mxu0
        %689 = vmatprep.mubr.bf16.mxu0 0
        %690 = vmatmul.mubr.bf16.gmra.mrb[0].mxu0 %v552
        %v691 = vpop.f32.mrb[0].mxu0
        %v692 = vadd.f32 %v358, %v691
        %v693 = vpop.f32.mrb[0].mxu0
        %v694 = vpop.f32.mrb[0].mxu0
        %v695 = vadd.f32 %v358, %v694
        %v696 = vpop.f32.mrb[0].mxu0
        %697 = vmatprep.mubr.bf16.mxu0 0
        %698 = vmatmul.mubr.bf16.gmra.mrb[0].mxu0 %v555
        %v699 = vpop.f32.mrb[0].mxu0
        %v700 = vadd.f32 %v358, %v699
        %v701 = vpop.f32.mrb[0].mxu0
        %v702 = vpop.f32.mrb[0].mxu0
        %v703 = vadd.f32 %v358, %v702
        %v704 = vpop.f32.mrb[0].mxu0
        %705 = vmatprep.mubr.bf16.mxu0 0
        %706 = vmatmul.mubr.bf16.gmra.mrb[0].mxu0 %v558
        %v707 = vpop.f32.mrb[0].mxu0
        %v708 = vadd.f32 %v358, %v707
        %v709 = vpop.f32.mrb[0].mxu0
        %v710 = vpop.f32.mrb[0].mxu0
        %v711 = vadd.f32 %v358, %v710
        %v712 = vpop.f32.mrb[0].mxu0
        %713 = vmatprep.mubr.bf16.mxu0 0
        %714 = vmatmul.mubr.bf16.gmra.mrb[0].mxu0 %v561
        %v715 = vpop.f32.mrb[0].mxu0
        %v716 = vadd.f32 %v358, %v715
        %v717 = vpop.f32.mrb[0].mxu0
        %v718 = vpop.f32.mrb[0].mxu0
        %v719 = vadd.f32 %v358, %v718
        %v720 = vpop.f32.mrb[0].mxu0
        %721 = vmatprep.mubr.bf16.mxu0 0
        %722 = vmatmul.mubr.bf16.gmra.mrb[0].mxu0 %v564
        %v723 = vpop.f32.mrb[0].mxu0
        %v724 = vadd.f32 %v358, %v723
        %v725 = vpop.f32.mrb[0].mxu0
        %v726 = vpop.f32.mrb[0].mxu0
        %v727 = vadd.f32 %v358, %v726
        %v728 = vpop.f32.mrb[0].mxu0
        %729 = vmatprep.mubr.bf16.mxu0 0
        %730 = vmatmul.mubr.bf16.gmra.mrb[0].mxu0 %v567
        %v731 = vpop.f32.mrb[0].mxu0
        %v732 = vadd.f32 %v358, %v731
        %v733 = vpop.f32.mrb[0].mxu0
        %v734 = vpop.f32.mrb[0].mxu0
        %v735 = vadd.f32 %v358, %v734
        %v736 = vpop.f32.mrb[0].mxu0
        %737 = vmatprep.mubr.bf16.mxu0 0
        %738 = vmatmul.mubr.bf16.gmra.mrb[0].mxu0 %v570
        %v739 = vpop.f32.mrb[0].mxu0
        %v740 = vadd.f32 %v358, %v739
        %v741 = vpop.f32.mrb[0].mxu0
        %v742 = vpop.f32.mrb[0].mxu0
        %v743 = vadd.f32 %v358, %v742
        %v744 = vpop.f32.mrb[0].mxu0
        %745 = vmatprep.mubr.bf16.mxu0 0
        %746 = vmatmul.mubr.bf16.gmra.mrb[0].mxu0 %v573
        %v747 = vpop.f32.mrb[0].mxu0
        %v748 = vadd.f32 %v358, %v747
        %v749 = vpop.f32.mrb[0].mxu0
        %v750 = vpop.f32.mrb[0].mxu0
        %v751 = vadd.f32 %v358, %v750
        %v752 = vpop.f32.mrb[0].mxu0
        %753 = vmatprep.mubr.bf16.mxu0 0
        %754 = vmatmul.mubr.bf16.gmra.mrb[0].mxu0 %v576
        %v755 = vpop.f32.mrb[0].mxu0
        %v756 = vadd.f32 %v358, %v755
        %v757 = vpop.f32.mrb[0].mxu0
        %v758 = vpop.f32.mrb[0].mxu0
        %v759 = vadd.f32 %v358, %v758
        %v760 = vpop.f32.mrb[0].mxu0
        %761 = vmatprep.mubr.bf16.mxu0 0
        %762 = vmatmul.mubr.bf16.gmra.mrb[0].mxu0 %v579
        %v763 = vpop.f32.mrb[0].mxu0
        %v764 = vadd.f32 %v358, %v763
        %v765 = vpop.f32.mrb[0].mxu0
        %v766 = vpop.f32.mrb[0].mxu0
        %v767 = vadd.f32 %v358, %v766
        %v768 = vpop.f32.mrb[0].mxu0
        %769 = vmatprep.mubr.bf16.mxu0 0
        %770 = vmatmul.mubr.bf16.gmra.mrb[0].mxu0 %v582
        %v771 = vpop.f32.mrb[0].mxu0
        %v772 = vadd.f32 %v358, %v771
        %v773 = vpop.f32.mrb[0].mxu0
        %v774 = vpop.f32.mrb[0].mxu0
        %v775 = vadd.f32 %v358, %v774
        %v776 = vpop.f32.mrb[0].mxu0
        %777 = vmatprep.mubr.bf16.mxu0 0
        %778 = vmatmul.mubr.bf16.gmra.mrb[0].mxu0 %v585
        %v779 = vpop.f32.mrb[0].mxu0
        %v780 = vadd.f32 %v358, %v779
        %v781 = vpop.f32.mrb[0].mxu0
        %v782 = vpop.f32.mrb[0].mxu0
        %v783 = vadd.f32 %v358, %v782
        %v784 = vpop.f32.mrb[0].mxu0
        %785 = vmatprep.mubr.bf16.mxu0 0
        %786 = vmatmul.mubr.bf16.gmra.mrb[0].mxu0 %v588
        %v787 = vpop.f32.mrb[0].mxu0
        %v788 = vadd.f32 %v358, %v787
        %v789 = vpop.f32.mrb[0].mxu0
        %v790 = vpop.f32.mrb[0].mxu0
        %v791 = vadd.f32 %v358, %v790
        %v792 = vpop.f32.mrb[0].mxu0
        %793 = vmatprep.mubr.bf16.mxu0 0
        %794 = vmatmul.mubr.bf16.gmra.mrb[0].mxu0 %v591
        %v795 = vpop.f32.mrb[0].mxu0
        %v796 = vadd.f32 %v358, %v795
        %v797 = vpop.f32.mrb[0].mxu0
        %v798 = vpop.f32.mrb[0].mxu0
        %v799 = vadd.f32 %v358, %v798
        %v800 = vpop.f32.mrb[0].mxu0
        %801 = vmatprep.mubr.bf16.mxu0 0
        %802 = vmatmul.mubr.bf16.gmra.mrb[0].mxu0 %v594
        %v803 = vpop.f32.mrb[0].mxu0
        %v804 = vadd.f32 %v358, %v803
        %v805 = vpop.f32.mrb[0].mxu0
        %v806 = vpop.f32.mrb[0].mxu0
        %v807 = vadd.f32 %v358, %v806
        %v808 = vpop.f32.mrb[0].mxu0
        %809 = vmatprep.mubr.bf16.mxu0 0
        %810 = vmatmul.mubr.bf16.gmra.mrb[0].mxu0 %v597
        %v811 = vpop.f32.mrb[0].mxu0
        %v812 = vadd.f32 %v358, %v811
        %v813 = vpop.f32.mrb[0].mxu0
        %v814 = vpop.f32.mrb[0].mxu0
        %v815 = vadd.f32 %v358, %v814
        %v816 = vpop.f32.mrb[0].mxu0
        %817 = vmatprep.mubr.bf16.mxu0 0
        %818 = vmatmul.mubr.bf16.gmra.mrb[0].mxu0 %v600
        %v819 = vpop.f32.mrb[0].mxu0
        %v820 = vadd.f32 %v358, %v819
        %v821 = vpop.f32.mrb[0].mxu0
        %v822 = vpop.f32.mrb[0].mxu0
        %v823 = vadd.f32 %v358, %v822
        %v824 = vpop.f32.mrb[0].mxu0
        %825 = vmatprep.mubr.bf16.mxu0 0
        %826 = vmatmul.mubr.bf16.gmra.mrb[0].mxu0 %v603
        %v827 = vpop.f32.mrb[0].mxu0
        %v828 = vadd.f32 %v358, %v827
        %v829 = vpop.f32.mrb[0].mxu0
        %v830 = vpop.f32.mrb[0].mxu0
        %v831 = vadd.f32 %v358, %v830
        %v832 = vpop.f32.mrb[0].mxu0
        %833 = vmatprep.mubr.bf16.mxu0 0
        %834 = vmatmul.mubr.bf16.gmra.mrb[0].mxu0 %v606
        %v835 = vpop.f32.mrb[0].mxu0
        %v836 = vadd.f32 %v358, %v835
        %v837 = vpop.f32.mrb[0].mxu0
        %v838 = vpop.f32.mrb[0].mxu0
        %v839 = vadd.f32 %v358, %v838
        %v840 = vpop.f32.mrb[0].mxu0
        %841 = vmatprep.mubr.bf16.mxu0 0
        %842 = vmatmul.mubr.bf16.gmra.mrb[0].mxu0 %v609
        %v843 = vpop.f32.mrb[0].mxu0
        %v844 = vadd.f32 %v358, %v843
        %v845 = vpop.f32.mrb[0].mxu0
        %v846 = vpop.f32.mrb[0].mxu0
        %v847 = vadd.f32 %v358, %v846
        %v848 = vpop.f32.mrb[0].mxu0
        %849 = vmatprep.mubr.bf16.mxu0 0
        %850 = vmatmul.mubr.bf16.gmra.mrb[0].mxu0 %v612
        %v851 = vpop.f32.mrb[0].mxu0
        %v852 = vadd.f32 %v358, %v851
        %v853 = vpop.f32.mrb[0].mxu0
        %v854 = vpop.f32.mrb[0].mxu0
        %v855 = vadd.f32 %v358, %v854
        %v856 = vpop.f32.mrb[0].mxu0
        %857 = vmatprep.mubr.bf16.mxu0 0
        %858 = vmatmul.mubr.bf16.gmra.mrb[0].mxu0 %v615
        %v859 = vpop.f32.mrb[0].mxu0
        %v860 = vadd.f32 %v358, %v859
        %v861 = vpop.f32.mrb[0].mxu0
        %v862 = vpop.f32.mrb[0].mxu0
        %v863 = vadd.f32 %v358, %v862
        %v864 = vpop.f32.mrb[0].mxu0
        %865 = vmatprep.mubr.bf16.mxu0 0
        %866 = vmatmul.mubr.bf16.gmra.mrb[0].mxu0 %v618
        %v867 = vpop.f32.mrb[0].mxu0
        %v868 = vadd.f32 %v358, %v867
        %v869 = vpop.f32.mrb[0].mxu0
        %v870 = vpop.f32.mrb[0].mxu0
        %v871 = vadd.f32 %v358, %v870
        %v872 = vpop.f32.mrb[0].mxu0
        %873 = vmatprep.mubr.bf16.mxu0 0
        %874 = vmatmul.mubr.bf16.gmra.mrb[0].mxu0 %v621
        %v875 = vpop.f32.mrb[0].mxu0
        %v876 = vadd.f32 %v358, %v875
        %v877 = vpop.f32.mrb[0].mxu0
        %v878 = vpop.f32.mrb[0].mxu0
        %v879 = vadd.f32 %v358, %v878
        %v880 = vpop.f32.mrb[0].mxu0
        %881 = vmatprep.mubr.bf16.mxu0 0
        %882 = vmatmul.mubr.bf16.gmra.mrb[0].mxu0 %v624
        %v883 = vpop.f32.mrb[0].mxu0
        %v884 = vadd.f32 %v358, %v883
        %v885 = vpop.f32.mrb[0].mxu0
        %v886 = vpop.f32.mrb[0].mxu0
        %v887 = vadd.f32 %v358, %v886
        %v888 = vpop.f32.mrb[0].mxu0
        %889 = vmatprep.mubr.bf16.mxu0 0
        %890 = vmatmul.mubr.bf16.gmra.mrb[0].mxu0 %v627
        %v891 = vpop.f32.mrb[0].mxu0
        %v892 = vadd.f32 %v358, %v891
        %v893 = vpop.f32.mrb[0].mxu0
        %v894 = vpop.f32.mrb[0].mxu0
        %v895 = vadd.f32 %v358, %v894
        %v896 = vpop.f32.mrb[0].mxu0
        %897 = vmatprep.mubr.bf16.mxu0 0
        %898 = vmatmul.mubr.bf16.gmra.mrb[0].mxu0 %v630
        %v899 = vpop.f32.mrb[0].mxu0
        %v900 = vadd.f32 %v358, %v899
        %v901 = vpop.f32.mrb[0].mxu0
        %v902 = vpop.f32.mrb[0].mxu0
        %v903 = vadd.f32 %v358, %v902
        %v904 = vpop.f32.mrb[0].mxu0
        %905 = vmatprep.mubr.bf16.mxu0 0
        %906 = vmatmul.mubr.bf16.gmra.mrb[0].mxu0 %v633
        %v907 = vpop.f32.mrb[0].mxu0
        %v908 = vadd.f32 %v358, %v907
        %v909 = vpop.f32.mrb[0].mxu0
        %v910 = vpop.f32.mrb[0].mxu0
        %v911 = vadd.f32 %v358, %v910
        %v912 = vpop.f32.mrb[0].mxu0
        %913 = vmatprep.mubr.bf16.mxu0 0
        %914 = vmatmul.mubr.bf16.gmra.mrb[0].mxu0 %v636
        %v915 = vpop.f32.mrb[0].mxu0
        %v916 = vadd.f32 %v358, %v915
        %v917 = vpop.f32.mrb[0].mxu0
        %v918 = vpop.f32.mrb[0].mxu0
        %v919 = vadd.f32 %v358, %v918
        %v920 = vpop.f32.mrb[0].mxu0
        %921 = vmatprep.mubr.bf16.mxu0 0
        %922 = vmatmul.mubr.bf16.gmra.mrb[0].mxu0 %v639
        %v923 = vpop.f32.mrb[0].mxu0
        %v924 = vadd.f32 %v358, %v923
        %v925 = vpop.f32.mrb[0].mxu0
        %v926 = vpop.f32.mrb[0].mxu0
        %v927 = vadd.f32 %v358, %v926
        %v928 = vpop.f32.mrb[0].mxu0
        %929 = vdwg.mxu0
        %v930 = vmax.f32 %v676, 0.0
        %v931 = vmax.f32 %v679, 0.0
        %v932 = vmax.f32 %v684, 0.0
        %v933 = vmax.f32 %v687, 0.0
        %v934 = vmax.f32 %v692, 0.0
        %v935 = vmax.f32 %v695, 0.0
        %v936 = vmax.f32 %v700, 0.0
        %v937 = vmax.f32 %v703, 0.0
        %v938 = vmax.f32 %v708, 0.0
        %v939 = vmax.f32 %v711, 0.0
        %v940 = vmax.f32 %v716, 0.0
        %v941 = vmax.f32 %v719, 0.0
        %v942 = vmax.f32 %v724, 0.0
        %v943 = vmax.f32 %v727, 0.0
        %v944 = vmax.f32 %v732, 0.0
        %v945 = vmax.f32 %v735, 0.0
        %v946 = vmax.f32 %v740, 0.0
        %v947 = vmax.f32 %v743, 0.0
        %v948 = vmax.f32 %v748, 0.0
        %v949 = vmax.f32 %v751, 0.0
        %v950 = vmax.f32 %v756, 0.0
        %v951 = vmax.f32 %v759, 0.0
        %v952 = vmax.f32 %v764, 0.0
        %v953 = vmax.f32 %v767, 0.0
        %v954 = vmax.f32 %v772, 0.0
        %v955 = vmax.f32 %v775, 0.0
        %v956 = vmax.f32 %v780, 0.0
        %v957 = vmax.f32 %v783, 0.0
        %v958 = vmax.f32 %v788, 0.0
        %v959 = vmax.f32 %v791, 0.0
        %v960 = vmax.f32 %v796, 0.0
        %v961 = vmax.f32 %v799, 0.0
        %v962 = vmax.f32 %v804, 0.0
        %v963 = vmax.f32 %v807, 0.0
        %v964 = vmax.f32 %v812, 0.0
        %v965 = vmax.f32 %v815, 0.0
        %v966 = vmax.f32 %v820, 0.0
        %v967 = vmax.f32 %v823, 0.0
        %v968 = vmax.f32 %v828, 0.0
        %v969 = vmax.f32 %v831, 0.0
        %v970 = vmax.f32 %v836, 0.0
        %v971 = vmax.f32 %v839, 0.0
        %v972 = vmax.f32 %v844, 0.0
        %v973 = vmax.f32 %v847, 0.0
        %v974 = vmax.f32 %v852, 0.0
        %v975 = vmax.f32 %v855, 0.0
        %v976 = vmax.f32 %v860, 0.0
        %v977 = vmax.f32 %v863, 0.0
        %v978 = vmax.f32 %v868, 0.0
        %v979 = vmax.f32 %v871, 0.0
        %v980 = vmax.f32 %v876, 0.0
        %v981 = vmax.f32 %v879, 0.0
        %v982 = vmax.f32 %v884, 0.0
        %v983 = vmax.f32 %v887, 0.0
        %v984 = vmax.f32 %v892, 0.0
        %v985 = vmax.f32 %v895, 0.0
        %v986 = vmax.f32 %v900, 0.0
        %v987 = vmax.f32 %v903, 0.0
        %v988 = vmax.f32 %v908, 0.0
        %v989 = vmax.f32 %v911, 0.0
        %v990 = vmax.f32 %v916, 0.0
        %v991 = vmax.f32 %v919, 0.0
        %v992 = vmax.f32 %v924, 0.0
        %v993 = vmax.f32 %v927, 0.0
        %v994 = vpack.c.bf16 %v931, %v930
        %v995 = vpack.c.bf16 %v933, %v932
        %v996 = vpack.c.bf16 %v935, %v934
        %v997 = vpack.c.bf16 %v937, %v936
        %v998 = vpack.c.bf16 %v939, %v938
        %v999 = vpack.c.bf16 %v941, %v940
        %v1000 = vpack.c.bf16 %v943, %v942
        %v1001 = vpack.c.bf16 %v945, %v944
        %v1002 = vpack.c.bf16 %v947, %v946
        %v1003 = vpack.c.bf16 %v949, %v948
        %v1004 = vpack.c.bf16 %v951, %v950
        %v1005 = vpack.c.bf16 %v953, %v952
        %v1006 = vpack.c.bf16 %v955, %v954
        %v1007 = vpack.c.bf16 %v957, %v956
        %v1008 = vpack.c.bf16 %v959, %v958
        %v1009 = vpack.c.bf16 %v961, %v960
        %v1010 = vpack.c.bf16 %v963, %v962
        %v1011 = vpack.c.bf16 %v965, %v964
        %v1012 = vpack.c.bf16 %v967, %v966
        %v1013 = vpack.c.bf16 %v969, %v968
        %v1014 = vpack.c.bf16 %v971, %v970
        %v1015 = vpack.c.bf16 %v973, %v972
        %v1016 = vpack.c.bf16 %v975, %v974
        %v1017 = vpack.c.bf16 %v977, %v976
        %v1018 = vpack.c.bf16 %v979, %v978
        %v1019 = vpack.c.bf16 %v981, %v980
        %v1020 = vpack.c.bf16 %v983, %v982
        %v1021 = vpack.c.bf16 %v985, %v984
        %v1022 = vpack.c.bf16 %v987, %v986
        %v1023 = vpack.c.bf16 %v989, %v988
        %v1024 = vpack.c.bf16 %v991, %v990
        %v1025 = vpack.c.bf16 %v993, %v992
        %v1026 = vld [vmem:[%s3] sm:$0xf]
        %v1027 = vld [vmem:[%s3 + $0x4] sm:$0xf]
        %v1028 = vld [vmem:[%s3 + $0x8] sm:$0xf]
        %v1029 = vld [vmem:[%s3 + $0xc] sm:$0xf]
        %v1030 = vld [vmem:[%s3 + $0x10] sm:$0xf]
        %v1031 = vld [vmem:[%s3 + $0x14] sm:$0xf]
        %v1032 = vld [vmem:[%s3 + $0x18] sm:$0xf]
        %v1033 = vld [vmem:[%s3 + $0x1c] sm:$0xf]
        %v1034 = vld [vmem:[%s3 + $0x20] sm:$0xf]
        %v1035 = vld [vmem:[%s3 + $0x24] sm:$0xf]
        %v1036 = vld [vmem:[%s3 + $0x28] sm:$0xf]
        %v1037 = vld [vmem:[%s3 + $0x2c] sm:$0xf]
        %v1038 = vld [vmem:[%s3 + $0x30] sm:$0xf]
        %v1039 = vld [vmem:[%s3 + $0x34] sm:$0xf]
        %v1040 = vld [vmem:[%s3 + $0x38] sm:$0xf]
        %v1041 = vld [vmem:[%s3 + $0x3c] sm:$0xf]
        %v1042 = vld [vmem:[%s4] sm:$0x1]
        %v1044 = vlaneseq
        %v1045 = vshrl.u32 %v1044, 7
        %v1046 = vsub.s32 0, %v1045
        %v1047 = vrot.slane %v1042, %v1046
        %v1065 = vunpack.c.l.b16 %v1026
        %v1066 = vunpack.c.l.b16 %v1027
        %v1067 = vunpack.c.l.b16 %v1028
        %v1068 = vunpack.c.l.b16 %v1029
        %v1069 = vunpack.c.l.b16 %v1030
        %v1070 = vunpack.c.l.b16 %v1031
        %v1071 = vunpack.c.l.b16 %v1032
        %v1072 = vunpack.c.l.b16 %v1033
        %v1073 = vunpack.c.l.b16 %v1034
        %v1074 = vunpack.c.l.b16 %v1035
        %v1075 = vunpack.c.l.b16 %v1036
        %v1076 = vunpack.c.l.b16 %v1037
        %v1077 = vunpack.c.l.b16 %v1038
        %v1078 = vunpack.c.l.b16 %v1039
        %v1079 = vunpack.c.l.b16 %v1040
        %v1080 = vunpack.c.l.b16 %v1041
        %v1081 = vpack.c.b16 %v1066, %v1065
        %v1082 = vpack.c.b16 %v1068, %v1067
        %v1083 = vpack.c.b16 %v1070, %v1069
        %v1084 = vpack.c.b16 %v1072, %v1071
        %v1085 = vpack.c.b16 %v1074, %v1073
        %v1086 = vpack.c.b16 %v1076, %v1075
        %v1087 = vpack.c.b16 %v1078, %v1077
        %v1088 = vpack.c.b16 %v1080, %v1079
        %1097 = vmatprep.subr.bf16.mxu0 0
        %1098 = vmatpush1.bf16.msra.mxu0 %v1081
        %1099 = vmatprep.subr.bf16.mxu0 0
        %1100 = vmatpush1.bf16.msra.mxu0 %v1082
        %1101 = vmatprep.subr.bf16.mxu0 0
        %1102 = vmatpush1.bf16.msra.mxu0 %v1083
        %1103 = vmatprep.subr.bf16.mxu0 0
        %1104 = vmatpush1.bf16.msra.mxu0 %v1084
        %1105 = vmatprep.subr.bf16.mxu0 0
        %1106 = vmatpush1.bf16.msra.mxu0 %v1085
        %1107 = vmatprep.subr.bf16.mxu0 0
        %1108 = vmatpush1.bf16.msra.mxu0 %v1086
        %1109 = vmatprep.subr.bf16.mxu0 0
        %1110 = vmatpush1.bf16.msra.mxu0 %v1087
        %1111 = vmatprep.subr.bf16.mxu0 0
        %1112 = vmatpush1.bf16.msra.mxu0 %v1088
        %1113 = vmatprep.subr.bf16.mxu0 0
        %1114 = vmatpush1.bf16.msra.mxu0 0
        %1115 = vmatprep.subr.bf16.mxu0 0
        %1116 = vmatpush1.bf16.msra.mxu0 0
        %1117 = vmatprep.subr.bf16.mxu0 0
        %1118 = vmatpush1.bf16.msra.mxu0 0
        %1119 = vmatprep.subr.bf16.mxu0 0
        %1120 = vmatpush1.bf16.msra.mxu0 0
        %1121 = vmatprep.subr.bf16.mxu0 0
        %1122 = vmatpush1.bf16.msra.mxu0 0
        %1123 = vmatprep.subr.bf16.mxu0 0
        %1124 = vmatpush1.bf16.msra.mxu0 0
        %1125 = vmatprep.subr.bf16.mxu0 0
        %1126 = vmatpush1.bf16.msra.mxu0 0
        %1127 = vmatprep.subr.bf16.mxu0 0
        %1128 = vmatpush1.bf16.msra.mxu0 0
        %1129 = vmatprep.mubr.bf16.mxu0 0
        %1130 = vmatmul.mubr.bf16.gmra.mrb[0].mxu0 %v994
        %v1131 = vpop.f32.mrb[0].mxu0
        %v1132 = vadd.f32 %v1047, %v1131
        %v1133 = vpop.f32.mrb[0].mxu0
        %v1134 = vpop.f32.mrb[0].mxu0
        %v1135 = vadd.f32 %v1047, %v1134
        %v1136 = vpop.f32.mrb[0].mxu0
        %1137 = vmatprep.mubr.bf16.mxu0 0
        %1138 = vmatmul.mubr.bf16.gmra.mrb[0].mxu0 %v995
        %v1139 = vpop.f32.mrb[0].mxu0
        %v1140 = vadd.f32 %v1047, %v1139
        %v1141 = vpop.f32.mrb[0].mxu0
        %v1142 = vpop.f32.mrb[0].mxu0
        %v1143 = vadd.f32 %v1047, %v1142
        %v1144 = vpop.f32.mrb[0].mxu0
        %1145 = vmatprep.mubr.bf16.mxu0 0
        %1146 = vmatmul.mubr.bf16.gmra.mrb[0].mxu0 %v996
        %v1147 = vpop.f32.mrb[0].mxu0
        %v1148 = vadd.f32 %v1047, %v1147
        %v1149 = vpop.f32.mrb[0].mxu0
        %v1150 = vpop.f32.mrb[0].mxu0
        %v1151 = vadd.f32 %v1047, %v1150
        %v1152 = vpop.f32.mrb[0].mxu0
        %1153 = vmatprep.mubr.bf16.mxu0 0
        %1154 = vmatmul.mubr.bf16.gmra.mrb[0].mxu0 %v997
        %v1155 = vpop.f32.mrb[0].mxu0
        %v1156 = vadd.f32 %v1047, %v1155
        %v1157 = vpop.f32.mrb[0].mxu0
        %v1158 = vpop.f32.mrb[0].mxu0
        %v1159 = vadd.f32 %v1047, %v1158
        %v1160 = vpop.f32.mrb[0].mxu0
        %1161 = vmatprep.mubr.bf16.mxu0 0
        %1162 = vmatmul.mubr.bf16.gmra.mrb[0].mxu0 %v998
        %v1163 = vpop.f32.mrb[0].mxu0
        %v1164 = vadd.f32 %v1047, %v1163
        %v1165 = vpop.f32.mrb[0].mxu0
        %v1166 = vpop.f32.mrb[0].mxu0
        %v1167 = vadd.f32 %v1047, %v1166
        %v1168 = vpop.f32.mrb[0].mxu0
        %1169 = vmatprep.mubr.bf16.mxu0 0
        %1170 = vmatmul.mubr.bf16.gmra.mrb[0].mxu0 %v999
        %v1171 = vpop.f32.mrb[0].mxu0
        %v1172 = vadd.f32 %v1047, %v1171
        %v1173 = vpop.f32.mrb[0].mxu0
        %v1174 = vpop.f32.mrb[0].mxu0
        %v1175 = vadd.f32 %v1047, %v1174
        %v1176 = vpop.f32.mrb[0].mxu0
        %1177 = vmatprep.mubr.bf16.mxu0 0
        %1178 = vmatmul.mubr.bf16.gmra.mrb[0].mxu0 %v1000
        %v1179 = vpop.f32.mrb[0].mxu0
        %v1180 = vadd.f32 %v1047, %v1179
        %v1181 = vpop.f32.mrb[0].mxu0
        %v1182 = vpop.f32.mrb[0].mxu0
        %v1183 = vadd.f32 %v1047, %v1182
        %v1184 = vpop.f32.mrb[0].mxu0
        %1185 = vmatprep.mubr.bf16.mxu0 0
        %1186 = vmatmul.mubr.bf16.gmra.mrb[0].mxu0 %v1001
        %v1187 = vpop.f32.mrb[0].mxu0
        %v1188 = vadd.f32 %v1047, %v1187
        %v1189 = vpop.f32.mrb[0].mxu0
        %v1190 = vpop.f32.mrb[0].mxu0
        %v1191 = vadd.f32 %v1047, %v1190
        %v1192 = vpop.f32.mrb[0].mxu0
        %1193 = vmatprep.mubr.bf16.mxu0 0
        %1194 = vmatmul.mubr.bf16.gmra.mrb[0].mxu0 %v1002
        %v1195 = vpop.f32.mrb[0].mxu0
        %v1196 = vadd.f32 %v1047, %v1195
        %v1197 = vpop.f32.mrb[0].mxu0
        %v1198 = vpop.f32.mrb[0].mxu0
        %v1199 = vadd.f32 %v1047, %v1198
        %v1200 = vpop.f32.mrb[0].mxu0
        %1201 = vmatprep.mubr.bf16.mxu0 0
        %1202 = vmatmul.mubr.bf16.gmra.mrb[0].mxu0 %v1003
        %v1203 = vpop.f32.mrb[0].mxu0
        %v1204 = vadd.f32 %v1047, %v1203
        %v1205 = vpop.f32.mrb[0].mxu0
        %v1206 = vpop.f32.mrb[0].mxu0
        %v1207 = vadd.f32 %v1047, %v1206
        %v1208 = vpop.f32.mrb[0].mxu0
        %1209 = vmatprep.mubr.bf16.mxu0 0
        %1210 = vmatmul.mubr.bf16.gmra.mrb[0].mxu0 %v1004
        %v1211 = vpop.f32.mrb[0].mxu0
        %v1212 = vadd.f32 %v1047, %v1211
        %v1213 = vpop.f32.mrb[0].mxu0
        %v1214 = vpop.f32.mrb[0].mxu0
        %v1215 = vadd.f32 %v1047, %v1214
        %v1216 = vpop.f32.mrb[0].mxu0
        %1217 = vmatprep.mubr.bf16.mxu0 0
        %1218 = vmatmul.mubr.bf16.gmra.mrb[0].mxu0 %v1005
        %v1219 = vpop.f32.mrb[0].mxu0
        %v1220 = vadd.f32 %v1047, %v1219
        %v1221 = vpop.f32.mrb[0].mxu0
        %v1222 = vpop.f32.mrb[0].mxu0
        %v1223 = vadd.f32 %v1047, %v1222
        %v1224 = vpop.f32.mrb[0].mxu0
        %1225 = vmatprep.mubr.bf16.mxu0 0
        %1226 = vmatmul.mubr.bf16.gmra.mrb[0].mxu0 %v1006
        %v1227 = vpop.f32.mrb[0].mxu0
        %v1228 = vadd.f32 %v1047, %v1227
        %v1229 = vpop.f32.mrb[0].mxu0
        %v1230 = vpop.f32.mrb[0].mxu0
        %v1231 = vadd.f32 %v1047, %v1230
        %v1232 = vpop.f32.mrb[0].mxu0
        %1233 = vmatprep.mubr.bf16.mxu0 0
        %1234 = vmatmul.mubr.bf16.gmra.mrb[0].mxu0 %v1007
        %v1235 = vpop.f32.mrb[0].mxu0
        %v1236 = vadd.f32 %v1047, %v1235
        %v1237 = vpop.f32.mrb[0].mxu0
        %v1238 = vpop.f32.mrb[0].mxu0
        %v1239 = vadd.f32 %v1047, %v1238
        %v1240 = vpop.f32.mrb[0].mxu0
        %1241 = vmatprep.mubr.bf16.mxu0 0
        %1242 = vmatmul.mubr.bf16.gmra.mrb[0].mxu0 %v1008
        %v1243 = vpop.f32.mrb[0].mxu0
        %v1244 = vadd.f32 %v1047, %v1243
        %v1245 = vpop.f32.mrb[0].mxu0
        %v1246 = vpop.f32.mrb[0].mxu0
        %v1247 = vadd.f32 %v1047, %v1246
        %v1248 = vpop.f32.mrb[0].mxu0
        %1249 = vmatprep.mubr.bf16.mxu0 0
        %1250 = vmatmul.mubr.bf16.gmra.mrb[0].mxu0 %v1009
        %v1251 = vpop.f32.mrb[0].mxu0
        %v1252 = vadd.f32 %v1047, %v1251
        %v1253 = vpop.f32.mrb[0].mxu0
        %v1254 = vpop.f32.mrb[0].mxu0
        %v1255 = vadd.f32 %v1047, %v1254
        %v1256 = vpop.f32.mrb[0].mxu0
        %1257 = vmatprep.mubr.bf16.mxu0 0
        %1258 = vmatmul.mubr.bf16.gmra.mrb[0].mxu0 %v1010
        %v1259 = vpop.f32.mrb[0].mxu0
        %v1260 = vadd.f32 %v1047, %v1259
        %v1261 = vpop.f32.mrb[0].mxu0
        %v1262 = vpop.f32.mrb[0].mxu0
        %v1263 = vadd.f32 %v1047, %v1262
        %v1264 = vpop.f32.mrb[0].mxu0
        %1265 = vmatprep.mubr.bf16.mxu0 0
        %1266 = vmatmul.mubr.bf16.gmra.mrb[0].mxu0 %v1011
        %v1267 = vpop.f32.mrb[0].mxu0
        %v1268 = vadd.f32 %v1047, %v1267
        %v1269 = vpop.f32.mrb[0].mxu0
        %v1270 = vpop.f32.mrb[0].mxu0
        %v1271 = vadd.f32 %v1047, %v1270
        %v1272 = vpop.f32.mrb[0].mxu0
        %1273 = vmatprep.mubr.bf16.mxu0 0
        %1274 = vmatmul.mubr.bf16.gmra.mrb[0].mxu0 %v1012
        %v1275 = vpop.f32.mrb[0].mxu0
        %v1276 = vadd.f32 %v1047, %v1275
        %v1277 = vpop.f32.mrb[0].mxu0
        %v1278 = vpop.f32.mrb[0].mxu0
        %v1279 = vadd.f32 %v1047, %v1278
        %v1280 = vpop.f32.mrb[0].mxu0
        %1281 = vmatprep.mubr.bf16.mxu0 0
        %1282 = vmatmul.mubr.bf16.gmra.mrb[0].mxu0 %v1013
        %v1283 = vpop.f32.mrb[0].mxu0
        %v1284 = vadd.f32 %v1047, %v1283
        %v1285 = vpop.f32.mrb[0].mxu0
        %v1286 = vpop.f32.mrb[0].mxu0
        %v1287 = vadd.f32 %v1047, %v1286
        %v1288 = vpop.f32.mrb[0].mxu0
        %1289 = vmatprep.mubr.bf16.mxu0 0
        %1290 = vmatmul.mubr.bf16.gmra.mrb[0].mxu0 %v1014
        %v1291 = vpop.f32.mrb[0].mxu0
        %v1292 = vadd.f32 %v1047, %v1291
        %v1293 = vpop.f32.mrb[0].mxu0
        %v1294 = vpop.f32.mrb[0].mxu0
        %v1295 = vadd.f32 %v1047, %v1294
        %v1296 = vpop.f32.mrb[0].mxu0
        %1297 = vmatprep.mubr.bf16.mxu0 0
        %1298 = vmatmul.mubr.bf16.gmra.mrb[0].mxu0 %v1015
        %v1299 = vpop.f32.mrb[0].mxu0
        %v1300 = vadd.f32 %v1047, %v1299
        %v1301 = vpop.f32.mrb[0].mxu0
        %v1302 = vpop.f32.mrb[0].mxu0
        %v1303 = vadd.f32 %v1047, %v1302
        %v1304 = vpop.f32.mrb[0].mxu0
        %1305 = vmatprep.mubr.bf16.mxu0 0
        %1306 = vmatmul.mubr.bf16.gmra.mrb[0].mxu0 %v1016
        %v1307 = vpop.f32.mrb[0].mxu0
        %v1308 = vadd.f32 %v1047, %v1307
        %v1309 = vpop.f32.mrb[0].mxu0
        %v1310 = vpop.f32.mrb[0].mxu0
        %v1311 = vadd.f32 %v1047, %v1310
        %v1312 = vpop.f32.mrb[0].mxu0
        %1313 = vmatprep.mubr.bf16.mxu0 0
        %1314 = vmatmul.mubr.bf16.gmra.mrb[0].mxu0 %v1017
        %v1315 = vpop.f32.mrb[0].mxu0
        %v1316 = vadd.f32 %v1047, %v1315
        %v1317 = vpop.f32.mrb[0].mxu0
        %v1318 = vpop.f32.mrb[0].mxu0
        %v1319 = vadd.f32 %v1047, %v1318
        %v1320 = vpop.f32.mrb[0].mxu0
        %1321 = vmatprep.mubr.bf16.mxu0 0
        %1322 = vmatmul.mubr.bf16.gmra.mrb[0].mxu0 %v1018
        %v1323 = vpop.f32.mrb[0].mxu0
        %v1324 = vadd.f32 %v1047, %v1323
        %v1325 = vpop.f32.mrb[0].mxu0
        %v1326 = vpop.f32.mrb[0].mxu0
        %v1327 = vadd.f32 %v1047, %v1326
        %v1328 = vpop.f32.mrb[0].mxu0
        %1329 = vmatprep.mubr.bf16.mxu0 0
        %1330 = vmatmul.mubr.bf16.gmra.mrb[0].mxu0 %v1019
        %v1331 = vpop.f32.mrb[0].mxu0
        %v1332 = vadd.f32 %v1047, %v1331
        %v1333 = vpop.f32.mrb[0].mxu0
        %v1334 = vpop.f32.mrb[0].mxu0
        %v1335 = vadd.f32 %v1047, %v1334
        %v1336 = vpop.f32.mrb[0].mxu0
        %1337 = vmatprep.mubr.bf16.mxu0 0
        %1338 = vmatmul.mubr.bf16.gmra.mrb[0].mxu0 %v1020
        %v1339 = vpop.f32.mrb[0].mxu0
        %v1340 = vadd.f32 %v1047, %v1339
        %v1341 = vpop.f32.mrb[0].mxu0
        %v1342 = vpop.f32.mrb[0].mxu0
        %v1343 = vadd.f32 %v1047, %v1342
        %v1344 = vpop.f32.mrb[0].mxu0
        %1345 = vmatprep.mubr.bf16.mxu0 0
        %1346 = vmatmul.mubr.bf16.gmra.mrb[0].mxu0 %v1021
        %v1347 = vpop.f32.mrb[0].mxu0
        %v1348 = vadd.f32 %v1047, %v1347
        %v1349 = vpop.f32.mrb[0].mxu0
        %v1350 = vpop.f32.mrb[0].mxu0
        %v1351 = vadd.f32 %v1047, %v1350
        %v1352 = vpop.f32.mrb[0].mxu0
        %1353 = vmatprep.mubr.bf16.mxu0 0
        %1354 = vmatmul.mubr.bf16.gmra.mrb[0].mxu0 %v1022
        %v1355 = vpop.f32.mrb[0].mxu0
        %v1356 = vadd.f32 %v1047, %v1355
        %v1357 = vpop.f32.mrb[0].mxu0
        %v1358 = vpop.f32.mrb[0].mxu0
        %v1359 = vadd.f32 %v1047, %v1358
        %v1360 = vpop.f32.mrb[0].mxu0
        %1361 = vmatprep.mubr.bf16.mxu0 0
        %1362 = vmatmul.mubr.bf16.gmra.mrb[0].mxu0 %v1023
        %v1363 = vpop.f32.mrb[0].mxu0
        %v1364 = vadd.f32 %v1047, %v1363
        %v1365 = vpop.f32.mrb[0].mxu0
        %v1366 = vpop.f32.mrb[0].mxu0
        %v1367 = vadd.f32 %v1047, %v1366
        %v1368 = vpop.f32.mrb[0].mxu0
        %1369 = vmatprep.mubr.bf16.mxu0 0
        %1370 = vmatmul.mubr.bf16.gmra.mrb[0].mxu0 %v1024
        %v1371 = vpop.f32.mrb[0].mxu0
        %v1372 = vadd.f32 %v1047, %v1371
        %v1373 = vpop.f32.mrb[0].mxu0
        %v1374 = vpop.f32.mrb[0].mxu0
        %v1375 = vadd.f32 %v1047, %v1374
        %v1376 = vpop.f32.mrb[0].mxu0
        %1377 = vmatprep.mubr.bf16.mxu0 0
        %1378 = vmatmul.mubr.bf16.gmra.mrb[0].mxu0 %v1025
        %v1379 = vpop.f32.mrb[0].mxu0
        %v1380 = vadd.f32 %v1047, %v1379
        %v1381 = vpop.f32.mrb[0].mxu0
        %v1382 = vpop.f32.mrb[0].mxu0
        %v1383 = vadd.f32 %v1047, %v1382
        %v1384 = vpop.f32.mrb[0].mxu0
        %1385 = vdwg.mxu0
        %v1386 = vmax.f32 %v1132, 0.0
        %v1387 = vmax.f32 %v1135, 0.0
        %v1388 = vmax.f32 %v1140, 0.0
        %v1389 = vmax.f32 %v1143, 0.0
        %v1390 = vmax.f32 %v1148, 0.0
        %v1391 = vmax.f32 %v1151, 0.0
        %v1392 = vmax.f32 %v1156, 0.0
        %v1393 = vmax.f32 %v1159, 0.0
        %v1394 = vmax.f32 %v1164, 0.0
        %v1395 = vmax.f32 %v1167, 0.0
        %v1396 = vmax.f32 %v1172, 0.0
        %v1397 = vmax.f32 %v1175, 0.0
        %v1398 = vmax.f32 %v1180, 0.0
        %v1399 = vmax.f32 %v1183, 0.0
        %v1400 = vmax.f32 %v1188, 0.0
        %v1401 = vmax.f32 %v1191, 0.0
        %v1402 = vmax.f32 %v1196, 0.0
        %v1403 = vmax.f32 %v1199, 0.0
        %v1404 = vmax.f32 %v1204, 0.0
        %v1405 = vmax.f32 %v1207, 0.0
        %v1406 = vmax.f32 %v1212, 0.0
        %v1407 = vmax.f32 %v1215, 0.0
        %v1408 = vmax.f32 %v1220, 0.0
        %v1409 = vmax.f32 %v1223, 0.0
        %v1410 = vmax.f32 %v1228, 0.0
        %v1411 = vmax.f32 %v1231, 0.0
        %v1412 = vmax.f32 %v1236, 0.0
        %v1413 = vmax.f32 %v1239, 0.0
        %v1414 = vmax.f32 %v1244, 0.0
        %v1415 = vmax.f32 %v1247, 0.0
        %v1416 = vmax.f32 %v1252, 0.0
        %v1417 = vmax.f32 %v1255, 0.0
        %v1418 = vmax.f32 %v1260, 0.0
        %v1419 = vmax.f32 %v1263, 0.0
        %v1420 = vmax.f32 %v1268, 0.0
        %v1421 = vmax.f32 %v1271, 0.0
        %v1422 = vmax.f32 %v1276, 0.0
        %v1423 = vmax.f32 %v1279, 0.0
        %v1424 = vmax.f32 %v1284, 0.0
        %v1425 = vmax.f32 %v1287, 0.0
        %v1426 = vmax.f32 %v1292, 0.0
        %v1427 = vmax.f32 %v1295, 0.0
        %v1428 = vmax.f32 %v1300, 0.0
        %v1429 = vmax.f32 %v1303, 0.0
        %v1430 = vmax.f32 %v1308, 0.0
        %v1431 = vmax.f32 %v1311, 0.0
        %v1432 = vmax.f32 %v1316, 0.0
        %v1433 = vmax.f32 %v1319, 0.0
        %v1434 = vmax.f32 %v1324, 0.0
        %v1435 = vmax.f32 %v1327, 0.0
        %v1436 = vmax.f32 %v1332, 0.0
        %v1437 = vmax.f32 %v1335, 0.0
        %v1438 = vmax.f32 %v1340, 0.0
        %v1439 = vmax.f32 %v1343, 0.0
        %v1440 = vmax.f32 %v1348, 0.0
        %v1441 = vmax.f32 %v1351, 0.0
        %v1442 = vmax.f32 %v1356, 0.0
        %v1443 = vmax.f32 %v1359, 0.0
        %v1444 = vmax.f32 %v1364, 0.0
        %v1445 = vmax.f32 %v1367, 0.0
        %v1446 = vmax.f32 %v1372, 0.0
        %v1447 = vmax.f32 %v1375, 0.0
        %v1448 = vmax.f32 %v1380, 0.0
        %v1449 = vmax.f32 %v1383, 0.0
        %v1450 = vpack.c.bf16 %v1387, %v1386
        %v1451 = vpack.c.bf16 %v1389, %v1388
        %v1452 = vpack.c.bf16 %v1391, %v1390
        %v1453 = vpack.c.bf16 %v1393, %v1392
        %v1454 = vpack.c.bf16 %v1395, %v1394
        %v1455 = vpack.c.bf16 %v1397, %v1396
        %v1456 = vpack.c.bf16 %v1399, %v1398
        %v1457 = vpack.c.bf16 %v1401, %v1400
        %v1458 = vpack.c.bf16 %v1403, %v1402
        %v1459 = vpack.c.bf16 %v1405, %v1404
        %v1460 = vpack.c.bf16 %v1407, %v1406
        %v1461 = vpack.c.bf16 %v1409, %v1408
        %v1462 = vpack.c.bf16 %v1411, %v1410
        %v1463 = vpack.c.bf16 %v1413, %v1412
        %v1464 = vpack.c.bf16 %v1415, %v1414
        %v1465 = vpack.c.bf16 %v1417, %v1416
        %v1466 = vpack.c.bf16 %v1419, %v1418
        %v1467 = vpack.c.bf16 %v1421, %v1420
        %v1468 = vpack.c.bf16 %v1423, %v1422
        %v1469 = vpack.c.bf16 %v1425, %v1424
        %v1470 = vpack.c.bf16 %v1427, %v1426
        %v1471 = vpack.c.bf16 %v1429, %v1428
        %v1472 = vpack.c.bf16 %v1431, %v1430
        %v1473 = vpack.c.bf16 %v1433, %v1432
        %v1474 = vpack.c.bf16 %v1435, %v1434
        %v1475 = vpack.c.bf16 %v1437, %v1436
        %v1476 = vpack.c.bf16 %v1439, %v1438
        %v1477 = vpack.c.bf16 %v1441, %v1440
        %v1478 = vpack.c.bf16 %v1443, %v1442
        %v1479 = vpack.c.bf16 %v1445, %v1444
        %v1480 = vpack.c.bf16 %v1447, %v1446
        %v1481 = vpack.c.bf16 %v1449, %v1448
        %v1482 = vld [vmem:[%s5] sm:$0xf]
        %v1483 = vld [vmem:[%s5 + $0x4] sm:$0xf]
        %v1484 = vld [vmem:[%s5 + $0x8] sm:$0xf]
        %v1485 = vld [vmem:[%s5 + $0xc] sm:$0xf]
        %v1486 = vld [vmem:[%s5 + $0x10] sm:$0xf]
        %v1487 = vld [vmem:[%s5 + $0x14] sm:$0xf]
        %v1488 = vld [vmem:[%s5 + $0x18] sm:$0xf]
        %v1489 = vld [vmem:[%s5 + $0x1c] sm:$0xf]
        %v1490 = vld [vmem:[%s5 + $0x20] sm:$0xf]
        %v1491 = vld [vmem:[%s5 + $0x24] sm:$0xf]
        %v1492 = vld [vmem:[%s5 + $0x28] sm:$0xf]
        %v1493 = vld [vmem:[%s5 + $0x2c] sm:$0xf]
        %v1494 = vld [vmem:[%s5 + $0x30] sm:$0xf]
        %v1495 = vld [vmem:[%s5 + $0x34] sm:$0xf]
        %v1496 = vld [vmem:[%s5 + $0x38] sm:$0xf]
        %v1497 = vld [vmem:[%s5 + $0x3c] sm:$0xf]
        %v1498 = vld [vmem:[%s6] sm:$0x1]
        %v1500 = vlaneseq
        %v1501 = vshrl.u32 %v1500, 7
        %v1502 = vsub.s32 0, %v1501
        %v1503 = vrot.slane %v1498, %v1502
        %v1521 = vunpack.c.l.b16 %v1482
        %v1522 = vunpack.c.l.b16 %v1483
        %v1523 = vunpack.c.l.b16 %v1484
        %v1524 = vunpack.c.l.b16 %v1485
        %v1525 = vunpack.c.l.b16 %v1486
        %v1526 = vunpack.c.l.b16 %v1487
        %v1527 = vunpack.c.l.b16 %v1488
        %v1528 = vunpack.c.l.b16 %v1489
        %v1529 = vunpack.c.l.b16 %v1490
        %v1530 = vunpack.c.l.b16 %v1491
        %v1531 = vunpack.c.l.b16 %v1492
        %v1532 = vunpack.c.l.b16 %v1493
        %v1533 = vunpack.c.l.b16 %v1494
        %v1534 = vunpack.c.l.b16 %v1495
        %v1535 = vunpack.c.l.b16 %v1496
        %v1536 = vunpack.c.l.b16 %v1497
        %v1537 = vpack.c.b16 %v1522, %v1521
        %v1538 = vpack.c.b16 %v1524, %v1523
        %v1539 = vpack.c.b16 %v1526, %v1525
        %v1540 = vpack.c.b16 %v1528, %v1527
        %v1541 = vpack.c.b16 %v1530, %v1529
        %v1542 = vpack.c.b16 %v1532, %v1531
        %v1543 = vpack.c.b16 %v1534, %v1533
        %v1544 = vpack.c.b16 %v1536, %v1535
        %1553 = vmatprep.subr.bf16.mxu0 0
        %1554 = vmatpush1.bf16.msra.mxu0 %v1537
        %1555 = vmatprep.subr.bf16.mxu0 0
        %1556 = vmatpush1.bf16.msra.mxu0 %v1538
        %1557 = vmatprep.subr.bf16.mxu0 0
        %1558 = vmatpush1.bf16.msra.mxu0 %v1539
        %1559 = vmatprep.subr.bf16.mxu0 0
        %1560 = vmatpush1.bf16.msra.mxu0 %v1540
        %1561 = vmatprep.subr.bf16.mxu0 0
        %1562 = vmatpush1.bf16.msra.mxu0 %v1541
        %1563 = vmatprep.subr.bf16.mxu0 0
        %1564 = vmatpush1.bf16.msra.mxu0 %v1542
        %1565 = vmatprep.subr.bf16.mxu0 0
        %1566 = vmatpush1.bf16.msra.mxu0 %v1543
        %1567 = vmatprep.subr.bf16.mxu0 0
        %1568 = vmatpush1.bf16.msra.mxu0 %v1544
        %1569 = vmatprep.subr.bf16.mxu0 0
        %1570 = vmatpush1.bf16.msra.mxu0 0
        %1571 = vmatprep.subr.bf16.mxu0 0
        %1572 = vmatpush1.bf16.msra.mxu0 0
        %1573 = vmatprep.subr.bf16.mxu0 0
        %1574 = vmatpush1.bf16.msra.mxu0 0
        %1575 = vmatprep.subr.bf16.mxu0 0
        %1576 = vmatpush1.bf16.msra.mxu0 0
        %1577 = vmatprep.subr.bf16.mxu0 0
        %1578 = vmatpush1.bf16.msra.mxu0 0
        %1579 = vmatprep.subr.bf16.mxu0 0
        %1580 = vmatpush1.bf16.msra.mxu0 0
        %1581 = vmatprep.subr.bf16.mxu0 0
        %1582 = vmatpush1.bf16.msra.mxu0 0
        %1583 = vmatprep.subr.bf16.mxu0 0
        %1584 = vmatpush1.bf16.msra.mxu0 0
        %1585 = vmatprep.mubr.bf16.mxu0 0
        %1586 = vmatmul.mubr.bf16.gmra.mrb[0].mxu0 %v1450
        %v1587 = vpop.f32.mrb[0].mxu0
        %v1588 = vadd.f32 %v1503, %v1587
        %v1589 = vpop.f32.mrb[0].mxu0
        %v1590 = vpop.f32.mrb[0].mxu0
        %v1591 = vadd.f32 %v1503, %v1590
        %v1592 = vpop.f32.mrb[0].mxu0
        %1593 = vmatprep.mubr.bf16.mxu0 0
        %1594 = vmatmul.mubr.bf16.gmra.mrb[0].mxu0 %v1451
        %v1595 = vpop.f32.mrb[0].mxu0
        %v1596 = vadd.f32 %v1503, %v1595
        %v1597 = vpop.f32.mrb[0].mxu0
        %v1598 = vpop.f32.mrb[0].mxu0
        %v1599 = vadd.f32 %v1503, %v1598
        %v1600 = vpop.f32.mrb[0].mxu0
        %1601 = vmatprep.mubr.bf16.mxu0 0
        %1602 = vmatmul.mubr.bf16.gmra.mrb[0].mxu0 %v1452
        %v1603 = vpop.f32.mrb[0].mxu0
        %v1604 = vadd.f32 %v1503, %v1603
        %v1605 = vpop.f32.mrb[0].mxu0
        %v1606 = vpop.f32.mrb[0].mxu0
        %v1607 = vadd.f32 %v1503, %v1606
        %v1608 = vpop.f32.mrb[0].mxu0
        %1609 = vmatprep.mubr.bf16.mxu0 0
        %1610 = vmatmul.mubr.bf16.gmra.mrb[0].mxu0 %v1453
        %v1611 = vpop.f32.mrb[0].mxu0
        %v1612 = vadd.f32 %v1503, %v1611
        %v1613 = vpop.f32.mrb[0].mxu0
        %v1614 = vpop.f32.mrb[0].mxu0
        %v1615 = vadd.f32 %v1503, %v1614
        %v1616 = vpop.f32.mrb[0].mxu0
        %1617 = vmatprep.mubr.bf16.mxu0 0
        %1618 = vmatmul.mubr.bf16.gmra.mrb[0].mxu0 %v1454
        %v1619 = vpop.f32.mrb[0].mxu0
        %v1620 = vadd.f32 %v1503, %v1619
        %v1621 = vpop.f32.mrb[0].mxu0
        %v1622 = vpop.f32.mrb[0].mxu0
        %v1623 = vadd.f32 %v1503, %v1622
        %v1624 = vpop.f32.mrb[0].mxu0
        %1625 = vmatprep.mubr.bf16.mxu0 0
        %1626 = vmatmul.mubr.bf16.gmra.mrb[0].mxu0 %v1455
        %v1627 = vpop.f32.mrb[0].mxu0
        %v1628 = vadd.f32 %v1503, %v1627
        %v1629 = vpop.f32.mrb[0].mxu0
        %v1630 = vpop.f32.mrb[0].mxu0
        %v1631 = vadd.f32 %v1503, %v1630
        %v1632 = vpop.f32.mrb[0].mxu0
        %1633 = vmatprep.mubr.bf16.mxu0 0
        %1634 = vmatmul.mubr.bf16.gmra.mrb[0].mxu0 %v1456
        %v1635 = vpop.f32.mrb[0].mxu0
        %v1636 = vadd.f32 %v1503, %v1635
        %v1637 = vpop.f32.mrb[0].mxu0
        %v1638 = vpop.f32.mrb[0].mxu0
        %v1639 = vadd.f32 %v1503, %v1638
        %v1640 = vpop.f32.mrb[0].mxu0
        %1641 = vmatprep.mubr.bf16.mxu0 0
        %1642 = vmatmul.mubr.bf16.gmra.mrb[0].mxu0 %v1457
        %v1643 = vpop.f32.mrb[0].mxu0
        %v1644 = vadd.f32 %v1503, %v1643
        %v1645 = vpop.f32.mrb[0].mxu0
        %v1646 = vpop.f32.mrb[0].mxu0
        %v1647 = vadd.f32 %v1503, %v1646
        %v1648 = vpop.f32.mrb[0].mxu0
        %1649 = vmatprep.mubr.bf16.mxu0 0
        %1650 = vmatmul.mubr.bf16.gmra.mrb[0].mxu0 %v1458
        %v1651 = vpop.f32.mrb[0].mxu0
        %v1652 = vadd.f32 %v1503, %v1651
        %v1653 = vpop.f32.mrb[0].mxu0
        %v1654 = vpop.f32.mrb[0].mxu0
        %v1655 = vadd.f32 %v1503, %v1654
        %v1656 = vpop.f32.mrb[0].mxu0
        %1657 = vmatprep.mubr.bf16.mxu0 0
        %1658 = vmatmul.mubr.bf16.gmra.mrb[0].mxu0 %v1459
        %v1659 = vpop.f32.mrb[0].mxu0
        %v1660 = vadd.f32 %v1503, %v1659
        %v1661 = vpop.f32.mrb[0].mxu0
        %v1662 = vpop.f32.mrb[0].mxu0
        %v1663 = vadd.f32 %v1503, %v1662
        %v1664 = vpop.f32.mrb[0].mxu0
        %1665 = vmatprep.mubr.bf16.mxu0 0
        %1666 = vmatmul.mubr.bf16.gmra.mrb[0].mxu0 %v1460
        %v1667 = vpop.f32.mrb[0].mxu0
        %v1668 = vadd.f32 %v1503, %v1667
        %v1669 = vpop.f32.mrb[0].mxu0
        %v1670 = vpop.f32.mrb[0].mxu0
        %v1671 = vadd.f32 %v1503, %v1670
        %v1672 = vpop.f32.mrb[0].mxu0
        %1673 = vmatprep.mubr.bf16.mxu0 0
        %1674 = vmatmul.mubr.bf16.gmra.mrb[0].mxu0 %v1461
        %v1675 = vpop.f32.mrb[0].mxu0
        %v1676 = vadd.f32 %v1503, %v1675
        %v1677 = vpop.f32.mrb[0].mxu0
        %v1678 = vpop.f32.mrb[0].mxu0
        %v1679 = vadd.f32 %v1503, %v1678
        %v1680 = vpop.f32.mrb[0].mxu0
        %1681 = vmatprep.mubr.bf16.mxu0 0
        %1682 = vmatmul.mubr.bf16.gmra.mrb[0].mxu0 %v1462
        %v1683 = vpop.f32.mrb[0].mxu0
        %v1684 = vadd.f32 %v1503, %v1683
        %v1685 = vpop.f32.mrb[0].mxu0
        %v1686 = vpop.f32.mrb[0].mxu0
        %v1687 = vadd.f32 %v1503, %v1686
        %v1688 = vpop.f32.mrb[0].mxu0
        %1689 = vmatprep.mubr.bf16.mxu0 0
        %1690 = vmatmul.mubr.bf16.gmra.mrb[0].mxu0 %v1463
        %v1691 = vpop.f32.mrb[0].mxu0
        %v1692 = vadd.f32 %v1503, %v1691
        %v1693 = vpop.f32.mrb[0].mxu0
        %v1694 = vpop.f32.mrb[0].mxu0
        %v1695 = vadd.f32 %v1503, %v1694
        %v1696 = vpop.f32.mrb[0].mxu0
        %1697 = vmatprep.mubr.bf16.mxu0 0
        %1698 = vmatmul.mubr.bf16.gmra.mrb[0].mxu0 %v1464
        %v1699 = vpop.f32.mrb[0].mxu0
        %v1700 = vadd.f32 %v1503, %v1699
        %v1701 = vpop.f32.mrb[0].mxu0
        %v1702 = vpop.f32.mrb[0].mxu0
        %v1703 = vadd.f32 %v1503, %v1702
        %v1704 = vpop.f32.mrb[0].mxu0
        %1705 = vmatprep.mubr.bf16.mxu0 0
        %1706 = vmatmul.mubr.bf16.gmra.mrb[0].mxu0 %v1465
        %v1707 = vpop.f32.mrb[0].mxu0
        %v1708 = vadd.f32 %v1503, %v1707
        %v1709 = vpop.f32.mrb[0].mxu0
        %v1710 = vpop.f32.mrb[0].mxu0
        %v1711 = vadd.f32 %v1503, %v1710
        %v1712 = vpop.f32.mrb[0].mxu0
        %1713 = vmatprep.mubr.bf16.mxu0 0
        %1714 = vmatmul.mubr.bf16.gmra.mrb[0].mxu0 %v1466
        %v1715 = vpop.f32.mrb[0].mxu0
        %v1716 = vadd.f32 %v1503, %v1715
        %v1717 = vpop.f32.mrb[0].mxu0
        %v1718 = vpop.f32.mrb[0].mxu0
        %v1719 = vadd.f32 %v1503, %v1718
        %v1720 = vpop.f32.mrb[0].mxu0
        %1721 = vmatprep.mubr.bf16.mxu0 0
        %1722 = vmatmul.mubr.bf16.gmra.mrb[0].mxu0 %v1467
        %v1723 = vpop.f32.mrb[0].mxu0
        %v1724 = vadd.f32 %v1503, %v1723
        %v1725 = vpop.f32.mrb[0].mxu0
        %v1726 = vpop.f32.mrb[0].mxu0
        %v1727 = vadd.f32 %v1503, %v1726
        %v1728 = vpop.f32.mrb[0].mxu0
        %1729 = vmatprep.mubr.bf16.mxu0 0
        %1730 = vmatmul.mubr.bf16.gmra.mrb[0].mxu0 %v1468
        %v1731 = vpop.f32.mrb[0].mxu0
        %v1732 = vadd.f32 %v1503, %v1731
        %v1733 = vpop.f32.mrb[0].mxu0
        %v1734 = vpop.f32.mrb[0].mxu0
        %v1735 = vadd.f32 %v1503, %v1734
        %v1736 = vpop.f32.mrb[0].mxu0
        %1737 = vmatprep.mubr.bf16.mxu0 0
        %1738 = vmatmul.mubr.bf16.gmra.mrb[0].mxu0 %v1469
        %v1739 = vpop.f32.mrb[0].mxu0
        %v1740 = vadd.f32 %v1503, %v1739
        %v1741 = vpop.f32.mrb[0].mxu0
        %v1742 = vpop.f32.mrb[0].mxu0
        %v1743 = vadd.f32 %v1503, %v1742
        %v1744 = vpop.f32.mrb[0].mxu0
        %1745 = vmatprep.mubr.bf16.mxu0 0
        %1746 = vmatmul.mubr.bf16.gmra.mrb[0].mxu0 %v1470
        %v1747 = vpop.f32.mrb[0].mxu0
        %v1748 = vadd.f32 %v1503, %v1747
        %v1749 = vpop.f32.mrb[0].mxu0
        %v1750 = vpop.f32.mrb[0].mxu0
        %v1751 = vadd.f32 %v1503, %v1750
        %v1752 = vpop.f32.mrb[0].mxu0
        %1753 = vmatprep.mubr.bf16.mxu0 0
        %1754 = vmatmul.mubr.bf16.gmra.mrb[0].mxu0 %v1471
        %v1755 = vpop.f32.mrb[0].mxu0
        %v1756 = vadd.f32 %v1503, %v1755
        %v1757 = vpop.f32.mrb[0].mxu0
        %v1758 = vpop.f32.mrb[0].mxu0
        %v1759 = vadd.f32 %v1503, %v1758
        %v1760 = vpop.f32.mrb[0].mxu0
        %1761 = vmatprep.mubr.bf16.mxu0 0
        %1762 = vmatmul.mubr.bf16.gmra.mrb[0].mxu0 %v1472
        %v1763 = vpop.f32.mrb[0].mxu0
        %v1764 = vadd.f32 %v1503, %v1763
        %v1765 = vpop.f32.mrb[0].mxu0
        %v1766 = vpop.f32.mrb[0].mxu0
        %v1767 = vadd.f32 %v1503, %v1766
        %v1768 = vpop.f32.mrb[0].mxu0
        %1769 = vmatprep.mubr.bf16.mxu0 0
        %1770 = vmatmul.mubr.bf16.gmra.mrb[0].mxu0 %v1473
        %v1771 = vpop.f32.mrb[0].mxu0
        %v1772 = vadd.f32 %v1503, %v1771
        %v1773 = vpop.f32.mrb[0].mxu0
        %v1774 = vpop.f32.mrb[0].mxu0
        %v1775 = vadd.f32 %v1503, %v1774
        %v1776 = vpop.f32.mrb[0].mxu0
        %1777 = vmatprep.mubr.bf16.mxu0 0
        %1778 = vmatmul.mubr.bf16.gmra.mrb[0].mxu0 %v1474
        %v1779 = vpop.f32.mrb[0].mxu0
        %v1780 = vadd.f32 %v1503, %v1779
        %v1781 = vpop.f32.mrb[0].mxu0
        %v1782 = vpop.f32.mrb[0].mxu0
        %v1783 = vadd.f32 %v1503, %v1782
        %v1784 = vpop.f32.mrb[0].mxu0
        %1785 = vmatprep.mubr.bf16.mxu0 0
        %1786 = vmatmul.mubr.bf16.gmra.mrb[0].mxu0 %v1475
        %v1787 = vpop.f32.mrb[0].mxu0
        %v1788 = vadd.f32 %v1503, %v1787
        %v1789 = vpop.f32.mrb[0].mxu0
        %v1790 = vpop.f32.mrb[0].mxu0
        %v1791 = vadd.f32 %v1503, %v1790
        %v1792 = vpop.f32.mrb[0].mxu0
        %1793 = vmatprep.mubr.bf16.mxu0 0
        %1794 = vmatmul.mubr.bf16.gmra.mrb[0].mxu0 %v1476
        %v1795 = vpop.f32.mrb[0].mxu0
        %v1796 = vadd.f32 %v1503, %v1795
        %v1797 = vpop.f32.mrb[0].mxu0
        %v1798 = vpop.f32.mrb[0].mxu0
        %v1799 = vadd.f32 %v1503, %v1798
        %v1800 = vpop.f32.mrb[0].mxu0
        %1801 = vmatprep.mubr.bf16.mxu0 0
        %1802 = vmatmul.mubr.bf16.gmra.mrb[0].mxu0 %v1477
        %v1803 = vpop.f32.mrb[0].mxu0
        %v1804 = vadd.f32 %v1503, %v1803
        %v1805 = vpop.f32.mrb[0].mxu0
        %v1806 = vpop.f32.mrb[0].mxu0
        %v1807 = vadd.f32 %v1503, %v1806
        %v1808 = vpop.f32.mrb[0].mxu0
        %1809 = vmatprep.mubr.bf16.mxu0 0
        %1810 = vmatmul.mubr.bf16.gmra.mrb[0].mxu0 %v1478
        %v1811 = vpop.f32.mrb[0].mxu0
        %v1812 = vadd.f32 %v1503, %v1811
        %v1813 = vpop.f32.mrb[0].mxu0
        %v1814 = vpop.f32.mrb[0].mxu0
        %v1815 = vadd.f32 %v1503, %v1814
        %v1816 = vpop.f32.mrb[0].mxu0
        %1817 = vmatprep.mubr.bf16.mxu0 0
        %1818 = vmatmul.mubr.bf16.gmra.mrb[0].mxu0 %v1479
        %v1819 = vpop.f32.mrb[0].mxu0
        %v1820 = vadd.f32 %v1503, %v1819
        %v1821 = vpop.f32.mrb[0].mxu0
        %v1822 = vpop.f32.mrb[0].mxu0
        %v1823 = vadd.f32 %v1503, %v1822
        %v1824 = vpop.f32.mrb[0].mxu0
        %1825 = vmatprep.mubr.bf16.mxu0 0
        %1826 = vmatmul.mubr.bf16.gmra.mrb[0].mxu0 %v1480
        %v1827 = vpop.f32.mrb[0].mxu0
        %v1828 = vadd.f32 %v1503, %v1827
        %v1829 = vpop.f32.mrb[0].mxu0
        %v1830 = vpop.f32.mrb[0].mxu0
        %v1831 = vadd.f32 %v1503, %v1830
        %v1832 = vpop.f32.mrb[0].mxu0
        %1833 = vmatprep.mubr.bf16.mxu0 0
        %1834 = vmatmul.mubr.bf16.gmra.mrb[0].mxu0 %v1481
        %v1835 = vpop.f32.mrb[0].mxu0
        %v1836 = vadd.f32 %v1503, %v1835
        %v1837 = vpop.f32.mrb[0].mxu0
        %v1838 = vpop.f32.mrb[0].mxu0
        %v1839 = vadd.f32 %v1503, %v1838
        %v1840 = vpop.f32.mrb[0].mxu0
        %1841 = vdwg.mxu0
        %1842 = vmax.xlane.f32.xlu0 %v1588
        %v1843 = vpop.xlane.xlu0 %1842
        %1844 = vmax.xlane.f32.xlu0 %v1591
        %v1845 = vpop.xlane.xlu0 %1844
        %1846 = vmax.xlane.f32.xlu0 %v1596
        %v1847 = vpop.xlane.xlu0 %1846
        %1848 = vmax.xlane.f32.xlu0 %v1599
        %v1849 = vpop.xlane.xlu0 %1848
        %1850 = vmax.xlane.f32.xlu0 %v1604
        %v1851 = vpop.xlane.xlu0 %1850
        %1852 = vmax.xlane.f32.xlu0 %v1607
        %v1853 = vpop.xlane.xlu0 %1852
        %1854 = vmax.xlane.f32.xlu0 %v1612
        %v1855 = vpop.xlane.xlu0 %1854
        %1856 = vmax.xlane.f32.xlu0 %v1615
        %v1857 = vpop.xlane.xlu0 %1856
        %1858 = vmax.xlane.f32.xlu0 %v1620
        %v1859 = vpop.xlane.xlu0 %1858
        %1860 = vmax.xlane.f32.xlu0 %v1623
        %v1861 = vpop.xlane.xlu0 %1860
        %1862 = vmax.xlane.f32.xlu0 %v1628
        %v1863 = vpop.xlane.xlu0 %1862
        %1864 = vmax.xlane.f32.xlu0 %v1631
        %v1865 = vpop.xlane.xlu0 %1864
        %1866 = vmax.xlane.f32.xlu0 %v1636
        %v1867 = vpop.xlane.xlu0 %1866
        %1868 = vmax.xlane.f32.xlu0 %v1639
        %v1869 = vpop.xlane.xlu0 %1868
        %1870 = vmax.xlane.f32.xlu0 %v1644
        %v1871 = vpop.xlane.xlu0 %1870
        %1872 = vmax.xlane.f32.xlu0 %v1647
        %v1873 = vpop.xlane.xlu0 %1872
        %1874 = vmax.xlane.f32.xlu0 %v1652
        %v1875 = vpop.xlane.xlu0 %1874
        %1876 = vmax.xlane.f32.xlu0 %v1655
        %v1877 = vpop.xlane.xlu0 %1876
        %1878 = vmax.xlane.f32.xlu0 %v1660
        %v1879 = vpop.xlane.xlu0 %1878
        %1880 = vmax.xlane.f32.xlu0 %v1663
        %v1881 = vpop.xlane.xlu0 %1880
        %1882 = vmax.xlane.f32.xlu0 %v1668
        %v1883 = vpop.xlane.xlu0 %1882
        %1884 = vmax.xlane.f32.xlu0 %v1671
        %v1885 = vpop.xlane.xlu0 %1884
        %1886 = vmax.xlane.f32.xlu0 %v1676
        %v1887 = vpop.xlane.xlu0 %1886
        %1888 = vmax.xlane.f32.xlu0 %v1679
        %v1889 = vpop.xlane.xlu0 %1888
        %1890 = vmax.xlane.f32.xlu0 %v1684
        %v1891 = vpop.xlane.xlu0 %1890
        %1892 = vmax.xlane.f32.xlu0 %v1687
        %v1893 = vpop.xlane.xlu0 %1892
        %1894 = vmax.xlane.f32.xlu0 %v1692
        %v1895 = vpop.xlane.xlu0 %1894
        %1896 = vmax.xlane.f32.xlu0 %v1695
        %v1897 = vpop.xlane.xlu0 %1896
        %1898 = vmax.xlane.f32.xlu0 %v1700
        %v1899 = vpop.xlane.xlu0 %1898
        %1900 = vmax.xlane.f32.xlu0 %v1703
        %v1901 = vpop.xlane.xlu0 %1900
        %1902 = vmax.xlane.f32.xlu0 %v1708
        %v1903 = vpop.xlane.xlu0 %1902
        %1904 = vmax.xlane.f32.xlu0 %v1711
        %v1905 = vpop.xlane.xlu0 %1904
        %1906 = vmax.xlane.f32.xlu0 %v1716
        %v1907 = vpop.xlane.xlu0 %1906
        %1908 = vmax.xlane.f32.xlu0 %v1719
        %v1909 = vpop.xlane.xlu0 %1908
        %1910 = vmax.xlane.f32.xlu0 %v1724
        %v1911 = vpop.xlane.xlu0 %1910
        %1912 = vmax.xlane.f32.xlu0 %v1727
        %v1913 = vpop.xlane.xlu0 %1912
        %1914 = vmax.xlane.f32.xlu0 %v1732
        %v1915 = vpop.xlane.xlu0 %1914
        %1916 = vmax.xlane.f32.xlu0 %v1735
        %v1917 = vpop.xlane.xlu0 %1916
        %1918 = vmax.xlane.f32.xlu0 %v1740
        %v1919 = vpop.xlane.xlu0 %1918
        %1920 = vmax.xlane.f32.xlu0 %v1743
        %v1921 = vpop.xlane.xlu0 %1920
        %1922 = vmax.xlane.f32.xlu0 %v1748
        %v1923 = vpop.xlane.xlu0 %1922
        %1924 = vmax.xlane.f32.xlu0 %v1751
        %v1925 = vpop.xlane.xlu0 %1924
        %1926 = vmax.xlane.f32.xlu0 %v1756
        %v1927 = vpop.xlane.xlu0 %1926
        %1928 = vmax.xlane.f32.xlu0 %v1759
        %v1929 = vpop.xlane.xlu0 %1928
        %1930 = vmax.xlane.f32.xlu0 %v1764
        %v1931 = vpop.xlane.xlu0 %1930
        %1932 = vmax.xlane.f32.xlu0 %v1767
        %v1933 = vpop.xlane.xlu0 %1932
        %1934 = vmax.xlane.f32.xlu0 %v1772
        %v1935 = vpop.xlane.xlu0 %1934
        %1936 = vmax.xlane.f32.xlu0 %v1775
        %v1937 = vpop.xlane.xlu0 %1936
        %1938 = vmax.xlane.f32.xlu0 %v1780
        %v1939 = vpop.xlane.xlu0 %1938
        %1940 = vmax.xlane.f32.xlu0 %v1783
        %v1941 = vpop.xlane.xlu0 %1940
        %1942 = vmax.xlane.f32.xlu0 %v1788
        %v1943 = vpop.xlane.xlu0 %1942
        %1944 = vmax.xlane.f32.xlu0 %v1791
        %v1945 = vpop.xlane.xlu0 %1944
        %1946 = vmax.xlane.f32.xlu0 %v1796
        %v1947 = vpop.xlane.xlu0 %1946
        %1948 = vmax.xlane.f32.xlu0 %v1799
        %v1949 = vpop.xlane.xlu0 %1948
        %1950 = vmax.xlane.f32.xlu0 %v1804
        %v1951 = vpop.xlane.xlu0 %1950
        %1952 = vmax.xlane.f32.xlu0 %v1807
        %v1953 = vpop.xlane.xlu0 %1952
        %1954 = vmax.xlane.f32.xlu0 %v1812
        %v1955 = vpop.xlane.xlu0 %1954
        %1956 = vmax.xlane.f32.xlu0 %v1815
        %v1957 = vpop.xlane.xlu0 %1956
        %1958 = vmax.xlane.f32.xlu0 %v1820
        %v1959 = vpop.xlane.xlu0 %1958
        %1960 = vmax.xlane.f32.xlu0 %v1823
        %v1961 = vpop.xlane.xlu0 %1960
        %1962 = vmax.xlane.f32.xlu0 %v1828
        %v1963 = vpop.xlane.xlu0 %1962
        %1964 = vmax.xlane.f32.xlu0 %v1831
        %v1965 = vpop.xlane.xlu0 %1964
        %1966 = vmax.xlane.f32.xlu0 %v1836
        %v1967 = vpop.xlane.xlu0 %1966
        %1968 = vmax.xlane.f32.xlu0 %v1839
        %v1969 = vpop.xlane.xlu0 %1968
        %v1970 = vsub.f32 %v1588, %v1843
        %v1971 = vsub.f32 %v1591, %v1845
        %v1972 = vsub.f32 %v1596, %v1847
        %v1973 = vsub.f32 %v1599, %v1849
        %v1974 = vsub.f32 %v1604, %v1851
        %v1975 = vsub.f32 %v1607, %v1853
        %v1976 = vsub.f32 %v1612, %v1855
        %v1977 = vsub.f32 %v1615, %v1857
        %v1978 = vsub.f32 %v1620, %v1859
        %v1979 = vsub.f32 %v1623, %v1861
        %v1980 = vsub.f32 %v1628, %v1863
        %v1981 = vsub.f32 %v1631, %v1865
        %v1982 = vsub.f32 %v1636, %v1867
        %v1983 = vsub.f32 %v1639, %v1869
        %v1984 = vsub.f32 %v1644, %v1871
        %v1985 = vsub.f32 %v1647, %v1873
        %v1986 = vsub.f32 %v1652, %v1875
        %v1987 = vsub.f32 %v1655, %v1877
        %v1988 = vsub.f32 %v1660, %v1879
        %v1989 = vsub.f32 %v1663, %v1881
        %v1990 = vsub.f32 %v1668, %v1883
        %v1991 = vsub.f32 %v1671, %v1885
        %v1992 = vsub.f32 %v1676, %v1887
        %v1993 = vsub.f32 %v1679, %v1889
        %v1994 = vsub.f32 %v1684, %v1891
        %v1995 = vsub.f32 %v1687, %v1893
        %v1996 = vsub.f32 %v1692, %v1895
        %v1997 = vsub.f32 %v1695, %v1897
        %v1998 = vsub.f32 %v1700, %v1899
        %v1999 = vsub.f32 %v1703, %v1901
        %v2000 = vsub.f32 %v1708, %v1903
        %v2001 = vsub.f32 %v1711, %v1905
        %v2002 = vsub.f32 %v1716, %v1907
        %v2003 = vsub.f32 %v1719, %v1909
        %v2004 = vsub.f32 %v1724, %v1911
        %v2005 = vsub.f32 %v1727, %v1913
        %v2006 = vsub.f32 %v1732, %v1915
        %v2007 = vsub.f32 %v1735, %v1917
        %v2008 = vsub.f32 %v1740, %v1919
        %v2009 = vsub.f32 %v1743, %v1921
        %v2010 = vsub.f32 %v1748, %v1923
        %v2011 = vsub.f32 %v1751, %v1925
        %v2012 = vsub.f32 %v1756, %v1927
        %v2013 = vsub.f32 %v1759, %v1929
        %v2014 = vsub.f32 %v1764, %v1931
        %v2015 = vsub.f32 %v1767, %v1933
        %v2016 = vsub.f32 %v1772, %v1935
        %v2017 = vsub.f32 %v1775, %v1937
        %v2018 = vsub.f32 %v1780, %v1939
        %v2019 = vsub.f32 %v1783, %v1941
        %v2020 = vsub.f32 %v1788, %v1943
        %v2021 = vsub.f32 %v1791, %v1945
        %v2022 = vsub.f32 %v1796, %v1947
        %v2023 = vsub.f32 %v1799, %v1949
        %v2024 = vsub.f32 %v1804, %v1951
        %v2025 = vsub.f32 %v1807, %v1953
        %v2026 = vsub.f32 %v1812, %v1955
        %v2027 = vsub.f32 %v1815, %v1957
        %v2028 = vsub.f32 %v1820, %v1959
        %v2029 = vsub.f32 %v1823, %v1961
        %v2030 = vsub.f32 %v1828, %v1963
        %v2031 = vsub.f32 %v1831, %v1965
        %v2032 = vsub.f32 %v1836, %v1967
        %v2033 = vsub.f32 %v1839, %v1969
        %v2034 = vmul.f32 %v1970, 1.442695
        %v2035 = vpow.pop %v2034
        %v2036 = vmul.f32 %v1971, 1.442695
        %v2037 = vpow.pop %v2036
        %v2038 = vmul.f32 %v1972, 1.442695
        %v2039 = vpow.pop %v2038
        %v2040 = vmul.f32 %v1973, 1.442695
        %v2041 = vpow.pop %v2040
        %v2042 = vmul.f32 %v1974, 1.442695
        %v2043 = vpow.pop %v2042
        %v2044 = vmul.f32 %v1975, 1.442695
        %v2045 = vpow.pop %v2044
        %v2046 = vmul.f32 %v1976, 1.442695
        %v2047 = vpow.pop %v2046
        %v2048 = vmul.f32 %v1977, 1.442695
        %v2049 = vpow.pop %v2048
        %v2050 = vmul.f32 %v1978, 1.442695
        %v2051 = vpow.pop %v2050
        %v2052 = vmul.f32 %v1979, 1.442695
        %v2053 = vpow.pop %v2052
        %v2054 = vmul.f32 %v1980, 1.442695
        %v2055 = vpow.pop %v2054
        %v2056 = vmul.f32 %v1981, 1.442695
        %v2057 = vpow.pop %v2056
        %v2058 = vmul.f32 %v1982, 1.442695
        %v2059 = vpow.pop %v2058
        %v2060 = vmul.f32 %v1983, 1.442695
        %v2061 = vpow.pop %v2060
        %v2062 = vmul.f32 %v1984, 1.442695
        %v2063 = vpow.pop %v2062
        %v2064 = vmul.f32 %v1985, 1.442695
        %v2065 = vpow.pop %v2064
        %v2066 = vmul.f32 %v1986, 1.442695
        %v2067 = vpow.pop %v2066
        %v2068 = vmul.f32 %v1987, 1.442695
        %v2069 = vpow.pop %v2068
        %v2070 = vmul.f32 %v1988, 1.442695
        %v2071 = vpow.pop %v2070
        %v2072 = vmul.f32 %v1989, 1.442695
        %v2073 = vpow.pop %v2072
        %v2074 = vmul.f32 %v1990, 1.442695
        %v2075 = vpow.pop %v2074
        %v2076 = vmul.f32 %v1991, 1.442695
        %v2077 = vpow.pop %v2076
        %v2078 = vmul.f32 %v1992, 1.442695
        %v2079 = vpow.pop %v2078
        %v2080 = vmul.f32 %v1993, 1.442695
        %v2081 = vpow.pop %v2080
        %v2082 = vmul.f32 %v1994, 1.442695
        %v2083 = vpow.pop %v2082
        %v2084 = vmul.f32 %v1995, 1.442695
        %v2085 = vpow.pop %v2084
        %v2086 = vmul.f32 %v1996, 1.442695
        %v2087 = vpow.pop %v2086
        %v2088 = vmul.f32 %v1997, 1.442695
        %v2089 = vpow.pop %v2088
        %v2090 = vmul.f32 %v1998, 1.442695
        %v2091 = vpow.pop %v2090
        %v2092 = vmul.f32 %v1999, 1.442695
        %v2093 = vpow.pop %v2092
        %v2094 = vmul.f32 %v2000, 1.442695
        %v2095 = vpow.pop %v2094
        %v2096 = vmul.f32 %v2001, 1.442695
        %v2097 = vpow.pop %v2096
        %v2098 = vmul.f32 %v2002, 1.442695
        %v2099 = vpow.pop %v2098
        %v2100 = vmul.f32 %v2003, 1.442695
        %v2101 = vpow.pop %v2100
        %v2102 = vmul.f32 %v2004, 1.442695
        %v2103 = vpow.pop %v2102
        %v2104 = vmul.f32 %v2005, 1.442695
        %v2105 = vpow.pop %v2104
        %v2106 = vmul.f32 %v2006, 1.442695
        %v2107 = vpow.pop %v2106
        %v2108 = vmul.f32 %v2007, 1.442695
        %v2109 = vpow.pop %v2108
        %v2110 = vmul.f32 %v2008, 1.442695
        %v2111 = vpow.pop %v2110
        %v2112 = vmul.f32 %v2009, 1.442695
        %v2113 = vpow.pop %v2112
        %v2114 = vmul.f32 %v2010, 1.442695
        %v2115 = vpow.pop %v2114
        %v2116 = vmul.f32 %v2011, 1.442695
        %v2117 = vpow.pop %v2116
        %v2118 = vmul.f32 %v2012, 1.442695
        %v2119 = vpow.pop %v2118
        %v2120 = vmul.f32 %v2013, 1.442695
        %v2121 = vpow.pop %v2120
        %v2122 = vmul.f32 %v2014, 1.442695
        %v2123 = vpow.pop %v2122
        %v2124 = vmul.f32 %v2015, 1.442695
        %v2125 = vpow.pop %v2124
        %v2126 = vmul.f32 %v2016, 1.442695
        %v2127 = vpow.pop %v2126
        %v2128 = vmul.f32 %v2017, 1.442695
        %v2129 = vpow.pop %v2128
        %v2130 = vmul.f32 %v2018, 1.442695
        %v2131 = vpow.pop %v2130
        %v2132 = vmul.f32 %v2019, 1.442695
        %v2133 = vpow.pop %v2132
        %v2134 = vmul.f32 %v2020, 1.442695
        %v2135 = vpow.pop %v2134
        %v2136 = vmul.f32 %v2021, 1.442695
        %v2137 = vpow.pop %v2136
        %v2138 = vmul.f32 %v2022, 1.442695
        %v2139 = vpow.pop %v2138
        %v2140 = vmul.f32 %v2023, 1.442695
        %v2141 = vpow.pop %v2140
        %v2142 = vmul.f32 %v2024, 1.442695
        %v2143 = vpow.pop %v2142
        %v2144 = vmul.f32 %v2025, 1.442695
        %v2145 = vpow.pop %v2144
        %v2146 = vmul.f32 %v2026, 1.442695
        %v2147 = vpow.pop %v2146
        %v2148 = vmul.f32 %v2027, 1.442695
        %v2149 = vpow.pop %v2148
        %v2150 = vmul.f32 %v2028, 1.442695
        %v2151 = vpow.pop %v2150
        %v2152 = vmul.f32 %v2029, 1.442695
        %v2153 = vpow.pop %v2152
        %v2154 = vmul.f32 %v2030, 1.442695
        %v2155 = vpow.pop %v2154
        %v2156 = vmul.f32 %v2031, 1.442695
        %v2157 = vpow.pop %v2156
        %v2158 = vmul.f32 %v2032, 1.442695
        %v2159 = vpow.pop %v2158
        %v2160 = vmul.f32 %v2033, 1.442695
        %v2161 = vpow.pop %v2160
        %2162 = vadd.xlane.f32.xlu0 %v2035
        %v2163 = vpop.xlane.xlu0 %2162
        %2164 = vadd.xlane.f32.xlu0 %v2037
        %v2165 = vpop.xlane.xlu0 %2164
        %2166 = vadd.xlane.f32.xlu0 %v2039
        %v2167 = vpop.xlane.xlu0 %2166
        %2168 = vadd.xlane.f32.xlu0 %v2041
        %v2169 = vpop.xlane.xlu0 %2168
        %2170 = vadd.xlane.f32.xlu0 %v2043
        %v2171 = vpop.xlane.xlu0 %2170
        %2172 = vadd.xlane.f32.xlu0 %v2045
        %v2173 = vpop.xlane.xlu0 %2172
        %2174 = vadd.xlane.f32.xlu0 %v2047
        %v2175 = vpop.xlane.xlu0 %2174
        %2176 = vadd.xlane.f32.xlu0 %v2049
        %v2177 = vpop.xlane.xlu0 %2176
        %2178 = vadd.xlane.f32.xlu0 %v2051
        %v2179 = vpop.xlane.xlu0 %2178
        %2180 = vadd.xlane.f32.xlu0 %v2053
        %v2181 = vpop.xlane.xlu0 %2180
        %2182 = vadd.xlane.f32.xlu0 %v2055
        %v2183 = vpop.xlane.xlu0 %2182
        %2184 = vadd.xlane.f32.xlu0 %v2057
        %v2185 = vpop.xlane.xlu0 %2184
        %2186 = vadd.xlane.f32.xlu0 %v2059
        %v2187 = vpop.xlane.xlu0 %2186
        %2188 = vadd.xlane.f32.xlu0 %v2061
        %v2189 = vpop.xlane.xlu0 %2188
        %2190 = vadd.xlane.f32.xlu0 %v2063
        %v2191 = vpop.xlane.xlu0 %2190
        %2192 = vadd.xlane.f32.xlu0 %v2065
        %v2193 = vpop.xlane.xlu0 %2192
        %2194 = vadd.xlane.f32.xlu0 %v2067
        %v2195 = vpop.xlane.xlu0 %2194
        %2196 = vadd.xlane.f32.xlu0 %v2069
        %v2197 = vpop.xlane.xlu0 %2196
        %2198 = vadd.xlane.f32.xlu0 %v2071
        %v2199 = vpop.xlane.xlu0 %2198
        %2200 = vadd.xlane.f32.xlu0 %v2073
        %v2201 = vpop.xlane.xlu0 %2200
        %2202 = vadd.xlane.f32.xlu0 %v2075
        %v2203 = vpop.xlane.xlu0 %2202
        %2204 = vadd.xlane.f32.xlu0 %v2077
        %v2205 = vpop.xlane.xlu0 %2204
        %2206 = vadd.xlane.f32.xlu0 %v2079
        %v2207 = vpop.xlane.xlu0 %2206
        %2208 = vadd.xlane.f32.xlu0 %v2081
        %v2209 = vpop.xlane.xlu0 %2208
        %2210 = vadd.xlane.f32.xlu0 %v2083
        %v2211 = vpop.xlane.xlu0 %2210
        %2212 = vadd.xlane.f32.xlu0 %v2085
        %v2213 = vpop.xlane.xlu0 %2212
        %2214 = vadd.xlane.f32.xlu0 %v2087
        %v2215 = vpop.xlane.xlu0 %2214
        %2216 = vadd.xlane.f32.xlu0 %v2089
        %v2217 = vpop.xlane.xlu0 %2216
        %2218 = vadd.xlane.f32.xlu0 %v2091
        %v2219 = vpop.xlane.xlu0 %2218
        %2220 = vadd.xlane.f32.xlu0 %v2093
        %v2221 = vpop.xlane.xlu0 %2220
        %2222 = vadd.xlane.f32.xlu0 %v2095
        %v2223 = vpop.xlane.xlu0 %2222
        %2224 = vadd.xlane.f32.xlu0 %v2097
        %v2225 = vpop.xlane.xlu0 %2224
        %2226 = vadd.xlane.f32.xlu0 %v2099
        %v2227 = vpop.xlane.xlu0 %2226
        %2228 = vadd.xlane.f32.xlu0 %v2101
        %v2229 = vpop.xlane.xlu0 %2228
        %2230 = vadd.xlane.f32.xlu0 %v2103
        %v2231 = vpop.xlane.xlu0 %2230
        %2232 = vadd.xlane.f32.xlu0 %v2105
        %v2233 = vpop.xlane.xlu0 %2232
        %2234 = vadd.xlane.f32.xlu0 %v2107
        %v2235 = vpop.xlane.xlu0 %2234
        %2236 = vadd.xlane.f32.xlu0 %v2109
        %v2237 = vpop.xlane.xlu0 %2236
        %2238 = vadd.xlane.f32.xlu0 %v2111
        %v2239 = vpop.xlane.xlu0 %2238
        %2240 = vadd.xlane.f32.xlu0 %v2113
        %v2241 = vpop.xlane.xlu0 %2240
        %2242 = vadd.xlane.f32.xlu0 %v2115
        %v2243 = vpop.xlane.xlu0 %2242
        %2244 = vadd.xlane.f32.xlu0 %v2117
        %v2245 = vpop.xlane.xlu0 %2244
        %2246 = vadd.xlane.f32.xlu0 %v2119
        %v2247 = vpop.xlane.xlu0 %2246
        %2248 = vadd.xlane.f32.xlu0 %v2121
        %v2249 = vpop.xlane.xlu0 %2248
        %2250 = vadd.xlane.f32.xlu0 %v2123
        %v2251 = vpop.xlane.xlu0 %2250
        %2252 = vadd.xlane.f32.xlu0 %v2125
        %v2253 = vpop.xlane.xlu0 %2252
        %2254 = vadd.xlane.f32.xlu0 %v2127
        %v2255 = vpop.xlane.xlu0 %2254
        %2256 = vadd.xlane.f32.xlu0 %v2129
        %v2257 = vpop.xlane.xlu0 %2256
        %2258 = vadd.xlane.f32.xlu0 %v2131
        %v2259 = vpop.xlane.xlu0 %2258
        %2260 = vadd.xlane.f32.xlu0 %v2133
        %v2261 = vpop.xlane.xlu0 %2260
        %2262 = vadd.xlane.f32.xlu0 %v2135
        %v2263 = vpop.xlane.xlu0 %2262
        %2264 = vadd.xlane.f32.xlu0 %v2137
        %v2265 = vpop.xlane.xlu0 %2264
        %2266 = vadd.xlane.f32.xlu0 %v2139
        %v2267 = vpop.xlane.xlu0 %2266
        %2268 = vadd.xlane.f32.xlu0 %v2141
        %v2269 = vpop.xlane.xlu0 %2268
        %2270 = vadd.xlane.f32.xlu0 %v2143
        %v2271 = vpop.xlane.xlu0 %2270
        %2272 = vadd.xlane.f32.xlu0 %v2145
        %v2273 = vpop.xlane.xlu0 %2272
        %2274 = vadd.xlane.f32.xlu0 %v2147
        %v2275 = vpop.xlane.xlu0 %2274
        %2276 = vadd.xlane.f32.xlu0 %v2149
        %v2277 = vpop.xlane.xlu0 %2276
        %2278 = vadd.xlane.f32.xlu0 %v2151
        %v2279 = vpop.xlane.xlu0 %2278
        %2280 = vadd.xlane.f32.xlu0 %v2153
        %v2281 = vpop.xlane.xlu0 %2280
        %2282 = vadd.xlane.f32.xlu0 %v2155
        %v2283 = vpop.xlane.xlu0 %2282
        %2284 = vadd.xlane.f32.xlu0 %v2157
        %v2285 = vpop.xlane.xlu0 %2284
        %2286 = vadd.xlane.f32.xlu0 %v2159
        %v2287 = vpop.xlane.xlu0 %2286
        %2288 = vadd.xlane.f32.xlu0 %v2161
        %v2289 = vpop.xlane.xlu0 %2288
        %v2290 = vlog2.pop %v2163
        %v2291 = vmul.f32 %v2290, 0.6931472
        %v2292 = vlog2.pop %v2165
        %v2293 = vmul.f32 %v2292, 0.6931472
        %v2294 = vlog2.pop %v2167
        %v2295 = vmul.f32 %v2294, 0.6931472
        %v2296 = vlog2.pop %v2169
        %v2297 = vmul.f32 %v2296, 0.6931472
        %v2298 = vlog2.pop %v2171
        %v2299 = vmul.f32 %v2298, 0.6931472
        %v2300 = vlog2.pop %v2173
        %v2301 = vmul.f32 %v2300, 0.6931472
        %v2302 = vlog2.pop %v2175
        %v2303 = vmul.f32 %v2302, 0.6931472
        %v2304 = vlog2.pop %v2177
        %v2305 = vmul.f32 %v2304, 0.6931472
        %v2306 = vlog2.pop %v2179
        %v2307 = vmul.f32 %v2306, 0.6931472
        %v2308 = vlog2.pop %v2181
        %v2309 = vmul.f32 %v2308, 0.6931472
        %v2310 = vlog2.pop %v2183
        %v2311 = vmul.f32 %v2310, 0.6931472
        %v2312 = vlog2.pop %v2185
        %v2313 = vmul.f32 %v2312, 0.6931472
        %v2314 = vlog2.pop %v2187
        %v2315 = vmul.f32 %v2314, 0.6931472
        %v2316 = vlog2.pop %v2189
        %v2317 = vmul.f32 %v2316, 0.6931472
        %v2318 = vlog2.pop %v2191
        %v2319 = vmul.f32 %v2318, 0.6931472
        %v2320 = vlog2.pop %v2193
        %v2321 = vmul.f32 %v2320, 0.6931472
        %v2322 = vlog2.pop %v2195
        %v2323 = vmul.f32 %v2322, 0.6931472
        %v2324 = vlog2.pop %v2197
        %v2325 = vmul.f32 %v2324, 0.6931472
        %v2326 = vlog2.pop %v2199
        %v2327 = vmul.f32 %v2326, 0.6931472
        %v2328 = vlog2.pop %v2201
        %v2329 = vmul.f32 %v2328, 0.6931472
        %v2330 = vlog2.pop %v2203
        %v2331 = vmul.f32 %v2330, 0.6931472
        %v2332 = vlog2.pop %v2205
        %v2333 = vmul.f32 %v2332, 0.6931472
        %v2334 = vlog2.pop %v2207
        %v2335 = vmul.f32 %v2334, 0.6931472
        %v2336 = vlog2.pop %v2209
        %v2337 = vmul.f32 %v2336, 0.6931472
        %v2338 = vlog2.pop %v2211
        %v2339 = vmul.f32 %v2338, 0.6931472
        %v2340 = vlog2.pop %v2213
        %v2341 = vmul.f32 %v2340, 0.6931472
        %v2342 = vlog2.pop %v2215
        %v2343 = vmul.f32 %v2342, 0.6931472
        %v2344 = vlog2.pop %v2217
        %v2345 = vmul.f32 %v2344, 0.6931472
        %v2346 = vlog2.pop %v2219
        %v2347 = vmul.f32 %v2346, 0.6931472
        %v2348 = vlog2.pop %v2221
        %v2349 = vmul.f32 %v2348, 0.6931472
        %v2350 = vlog2.pop %v2223
        %v2351 = vmul.f32 %v2350, 0.6931472
        %v2352 = vlog2.pop %v2225
        %v2353 = vmul.f32 %v2352, 0.6931472
        %v2354 = vlog2.pop %v2227
        %v2355 = vmul.f32 %v2354, 0.6931472
        %v2356 = vlog2.pop %v2229
        %v2357 = vmul.f32 %v2356, 0.6931472
        %v2358 = vlog2.pop %v2231
        %v2359 = vmul.f32 %v2358, 0.6931472
        %v2360 = vlog2.pop %v2233
        %v2361 = vmul.f32 %v2360, 0.6931472
        %v2362 = vlog2.pop %v2235
        %v2363 = vmul.f32 %v2362, 0.6931472
        %v2364 = vlog2.pop %v2237
        %v2365 = vmul.f32 %v2364, 0.6931472
        %v2366 = vlog2.pop %v2239
        %v2367 = vmul.f32 %v2366, 0.6931472
        %v2368 = vlog2.pop %v2241
        %v2369 = vmul.f32 %v2368, 0.6931472
        %v2370 = vlog2.pop %v2243
        %v2371 = vmul.f32 %v2370, 0.6931472
        %v2372 = vlog2.pop %v2245
        %v2373 = vmul.f32 %v2372, 0.6931472
        %v2374 = vlog2.pop %v2247
        %v2375 = vmul.f32 %v2374, 0.6931472
        %v2376 = vlog2.pop %v2249
        %v2377 = vmul.f32 %v2376, 0.6931472
        %v2378 = vlog2.pop %v2251
        %v2379 = vmul.f32 %v2378, 0.6931472
        %v2380 = vlog2.pop %v2253
        %v2381 = vmul.f32 %v2380, 0.6931472
        %v2382 = vlog2.pop %v2255
        %v2383 = vmul.f32 %v2382, 0.6931472
        %v2384 = vlog2.pop %v2257
        %v2385 = vmul.f32 %v2384, 0.6931472
        %v2386 = vlog2.pop %v2259
        %v2387 = vmul.f32 %v2386, 0.6931472
        %v2388 = vlog2.pop %v2261
        %v2389 = vmul.f32 %v2388, 0.6931472
        %v2390 = vlog2.pop %v2263
        %v2391 = vmul.f32 %v2390, 0.6931472
        %v2392 = vlog2.pop %v2265
        %v2393 = vmul.f32 %v2392, 0.6931472
        %v2394 = vlog2.pop %v2267
        %v2395 = vmul.f32 %v2394, 0.6931472
        %v2396 = vlog2.pop %v2269
        %v2397 = vmul.f32 %v2396, 0.6931472
        %v2398 = vlog2.pop %v2271
        %v2399 = vmul.f32 %v2398, 0.6931472
        %v2400 = vlog2.pop %v2273
        %v2401 = vmul.f32 %v2400, 0.6931472
        %v2402 = vlog2.pop %v2275
        %v2403 = vmul.f32 %v2402, 0.6931472
        %v2404 = vlog2.pop %v2277
        %v2405 = vmul.f32 %v2404, 0.6931472
        %v2406 = vlog2.pop %v2279
        %v2407 = vmul.f32 %v2406, 0.6931472
        %v2408 = vlog2.pop %v2281
        %v2409 = vmul.f32 %v2408, 0.6931472
        %v2410 = vlog2.pop %v2283
        %v2411 = vmul.f32 %v2410, 0.6931472
        %v2412 = vlog2.pop %v2285
        %v2413 = vmul.f32 %v2412, 0.6931472
        %v2414 = vlog2.pop %v2287
        %v2415 = vmul.f32 %v2414, 0.6931472
        %v2416 = vlog2.pop %v2289
        %v2417 = vmul.f32 %v2416, 0.6931472
        %v2418 = vsub.f32 %v1970, %v2291
        %v2419 = vsub.f32 %v1971, %v2293
        %v2420 = vsub.f32 %v1972, %v2295
        %v2421 = vsub.f32 %v1973, %v2297
        %v2422 = vsub.f32 %v1974, %v2299
        %v2423 = vsub.f32 %v1975, %v2301
        %v2424 = vsub.f32 %v1976, %v2303
        %v2425 = vsub.f32 %v1977, %v2305
        %v2426 = vsub.f32 %v1978, %v2307
        %v2427 = vsub.f32 %v1979, %v2309
        %v2428 = vsub.f32 %v1980, %v2311
        %v2429 = vsub.f32 %v1981, %v2313
        %v2430 = vsub.f32 %v1982, %v2315
        %v2431 = vsub.f32 %v1983, %v2317
        %v2432 = vsub.f32 %v1984, %v2319
        %v2433 = vsub.f32 %v1985, %v2321
        %v2434 = vsub.f32 %v1986, %v2323
        %v2435 = vsub.f32 %v1987, %v2325
        %v2436 = vsub.f32 %v1988, %v2327
        %v2437 = vsub.f32 %v1989, %v2329
        %v2438 = vsub.f32 %v1990, %v2331
        %v2439 = vsub.f32 %v1991, %v2333
        %v2440 = vsub.f32 %v1992, %v2335
        %v2441 = vsub.f32 %v1993, %v2337
        %v2442 = vsub.f32 %v1994, %v2339
        %v2443 = vsub.f32 %v1995, %v2341
        %v2444 = vsub.f32 %v1996, %v2343
        %v2445 = vsub.f32 %v1997, %v2345
        %v2446 = vsub.f32 %v1998, %v2347
        %v2447 = vsub.f32 %v1999, %v2349
        %v2448 = vsub.f32 %v2000, %v2351
        %v2449 = vsub.f32 %v2001, %v2353
        %v2450 = vsub.f32 %v2002, %v2355
        %v2451 = vsub.f32 %v2003, %v2357
        %v2452 = vsub.f32 %v2004, %v2359
        %v2453 = vsub.f32 %v2005, %v2361
        %v2454 = vsub.f32 %v2006, %v2363
        %v2455 = vsub.f32 %v2007, %v2365
        %v2456 = vsub.f32 %v2008, %v2367
        %v2457 = vsub.f32 %v2009, %v2369
        %v2458 = vsub.f32 %v2010, %v2371
        %v2459 = vsub.f32 %v2011, %v2373
        %v2460 = vsub.f32 %v2012, %v2375
        %v2461 = vsub.f32 %v2013, %v2377
        %v2462 = vsub.f32 %v2014, %v2379
        %v2463 = vsub.f32 %v2015, %v2381
        %v2464 = vsub.f32 %v2016, %v2383
        %v2465 = vsub.f32 %v2017, %v2385
        %v2466 = vsub.f32 %v2018, %v2387
        %v2467 = vsub.f32 %v2019, %v2389
        %v2468 = vsub.f32 %v2020, %v2391
        %v2469 = vsub.f32 %v2021, %v2393
        %v2470 = vsub.f32 %v2022, %v2395
        %v2471 = vsub.f32 %v2023, %v2397
        %v2472 = vsub.f32 %v2024, %v2399
        %v2473 = vsub.f32 %v2025, %v2401
        %v2474 = vsub.f32 %v2026, %v2403
        %v2475 = vsub.f32 %v2027, %v2405
        %v2476 = vsub.f32 %v2028, %v2407
        %v2477 = vsub.f32 %v2029, %v2409
        %v2478 = vsub.f32 %v2030, %v2411
        %v2479 = vsub.f32 %v2031, %v2413
        %v2480 = vsub.f32 %v2032, %v2415
        %v2481 = vsub.f32 %v2033, %v2417
        %2482 = vst [vmem:[%s272] sm:$0xff] %v2418
        %2483 = vst [vmem:[%s272 + $0x8] sm:$0xff] %v2419
        %2484 = vst [vmem:[%s272 + $0x10] sm:$0xff] %v2420
        %2485 = vst [vmem:[%s272 + $0x18] sm:$0xff] %v2421
        %2486 = vst [vmem:[%s272 + $0x20] sm:$0xff] %v2422
        %2487 = vst [vmem:[%s272 + $0x28] sm:$0xff] %v2423
        %2488 = vst [vmem:[%s272 + $0x30] sm:$0xff] %v2424
        %2489 = vst [vmem:[%s272 + $0x38] sm:$0xff] %v2425
        %2490 = vst [vmem:[%s272 + $0x40] sm:$0xff] %v2426
        %2491 = vst [vmem:[%s272 + $0x48] sm:$0xff] %v2427
        %2492 = vst [vmem:[%s272 + $0x50] sm:$0xff] %v2428
        %2493 = vst [vmem:[%s272 + $0x58] sm:$0xff] %v2429
        %2494 = vst [vmem:[%s272 + $0x60] sm:$0xff] %v2430
        %2495 = vst [vmem:[%s272 + $0x68] sm:$0xff] %v2431
        %2496 = vst [vmem:[%s272 + $0x70] sm:$0xff] %v2432
        %2497 = vst [vmem:[%s272 + $0x78] sm:$0xff] %v2433
        %2498 = vst [vmem:[%s272 + $0x80] sm:$0xff] %v2434
        %2499 = vst [vmem:[%s272 + $0x88] sm:$0xff] %v2435
        %2500 = vst [vmem:[%s272 + $0x90] sm:$0xff] %v2436
        %2501 = vst [vmem:[%s272 + $0x98] sm:$0xff] %v2437
        %2502 = vst [vmem:[%s272 + $0xa0] sm:$0xff] %v2438
        %2503 = vst [vmem:[%s272 + $0xa8] sm:$0xff] %v2439
        %2504 = vst [vmem:[%s272 + $0xb0] sm:$0xff] %v2440
        %2505 = vst [vmem:[%s272 + $0xb8] sm:$0xff] %v2441
        %2506 = vst [vmem:[%s272 + $0xc0] sm:$0xff] %v2442
        %2507 = vst [vmem:[%s272 + $0xc8] sm:$0xff] %v2443
        %2508 = vst [vmem:[%s272 + $0xd0] sm:$0xff] %v2444
        %2509 = vst [vmem:[%s272 + $0xd8] sm:$0xff] %v2445
        %2510 = vst [vmem:[%s272 + $0xe0] sm:$0xff] %v2446
        %2511 = vst [vmem:[%s272 + $0xe8] sm:$0xff] %v2447
        %2512 = vst [vmem:[%s272 + $0xf0] sm:$0xff] %v2448
        %2513 = vst [vmem:[%s272 + $0xf8] sm:$0xff] %v2449
        %2514 = vst [vmem:[%s272 + $0x100] sm:$0xff] %v2450
        %2515 = vst [vmem:[%s272 + $0x108] sm:$0xff] %v2451
        %2516 = vst [vmem:[%s272 + $0x110] sm:$0xff] %v2452
        %2517 = vst [vmem:[%s272 + $0x118] sm:$0xff] %v2453
        %2518 = vst [vmem:[%s272 + $0x120] sm:$0xff] %v2454
        %2519 = vst [vmem:[%s272 + $0x128] sm:$0xff] %v2455
        %2520 = vst [vmem:[%s272 + $0x130] sm:$0xff] %v2456
        %2521 = vst [vmem:[%s272 + $0x138] sm:$0xff] %v2457
        %2522 = vst [vmem:[%s272 + $0x140] sm:$0xff] %v2458
        %2523 = vst [vmem:[%s272 + $0x148] sm:$0xff] %v2459
        %2524 = vst [vmem:[%s272 + $0x150] sm:$0xff] %v2460
        %2525 = vst [vmem:[%s272 + $0x158] sm:$0xff] %v2461
        %2526 = vst [vmem:[%s272 + $0x160] sm:$0xff] %v2462
        %2527 = vst [vmem:[%s272 + $0x168] sm:$0xff] %v2463
        %2528 = vst [vmem:[%s272 + $0x170] sm:$0xff] %v2464
        %2529 = vst [vmem:[%s272 + $0x178] sm:$0xff] %v2465
        %2530 = vst [vmem:[%s272 + $0x180] sm:$0xff] %v2466
        %2531 = vst [vmem:[%s272 + $0x188] sm:$0xff] %v2467
        %2532 = vst [vmem:[%s272 + $0x190] sm:$0xff] %v2468
        %2533 = vst [vmem:[%s272 + $0x198] sm:$0xff] %v2469
        %2534 = vst [vmem:[%s272 + $0x1a0] sm:$0xff] %v2470
        %2535 = vst [vmem:[%s272 + $0x1a8] sm:$0xff] %v2471
        %2536 = vst [vmem:[%s272 + $0x1b0] sm:$0xff] %v2472
        %2537 = vst [vmem:[%s272 + $0x1b8] sm:$0xff] %v2473
        %2538 = vst [vmem:[%s272 + $0x1c0] sm:$0xff] %v2474
        %2539 = vst [vmem:[%s272 + $0x1c8] sm:$0xff] %v2475
        %2540 = vst [vmem:[%s272 + $0x1d0] sm:$0xff] %v2476
        %2541 = vst [vmem:[%s272 + $0x1d8] sm:$0xff] %v2477
        %2542 = vst [vmem:[%s272 + $0x1e0] sm:$0xff] %v2478
        %2543 = vst [vmem:[%s272 + $0x1e8] sm:$0xff] %v2479
        %2544 = vst [vmem:[%s272 + $0x1f0] sm:$0xff] %v2480
        %2545 = vst [vmem:[%s272 + $0x1f8] sm:$0xff] %v2481
        %s2546 = sand.u32 %s181, 1
        %s2547 = scalar_lea.sflag [#allocation3], %s2546
        %s2548 = sand.u32 %s181, 1
        %s2549 = smul.addr %s2548, 512
        %s2550 = scalar_lea.vmem [#allocation2], %s2549
        // Predicated region
        $region49: #{tpu_custom_call.1} parent=47 // pred_check
          %p2551 = pneg %p191
        $region50: #{tpu_custom_call.1} parent=47 // pred_check_branch
          %2553 = sbr.rel (%p2551) target = $region52
        $region51: #{tpu_custom_call.1} parent=47 // pred_region
          %s2554 = smul.u32 64, %s21
          %s2556 = ssub.s32 8192, 8192
          %2557 = vsyncadd %s2547, %s2556
          %s2558 = smul.addr %s2554, 128
          %s2559 = scalar_lea.hbm %s7, %s2558
          %s2560 = sshll.u32 %s2550, 4
          %s2561 = int_to_ptr.vmem [resolvable:$true] %s2560
          %2566 = dma.vmem_to_hbm [thread:$0]  %s2561, 8192, %s2559, %s2547, 128, 128, 8
        $region52: #{tpu_custom_call.1} parent=47 // pred_fallthru
          _
      $region48: #{tpu_custom_call.1} parent=5 // pred_fallthru
        _
      %p2567 = scmp.le.s32.totalorder 2, %s16
      // Predicated region
      $region53: #{tpu_custom_call.1} parent=5 // pred_check
        %p2568 = pneg %p2567
      $region54: #{tpu_custom_call.1} parent=5 // pred_check_branch
        %2570 = sbr.rel (%p2568) target = $region56
      $region55: #{tpu_custom_call.1} parent=5 // pred_region
        %s2571 = ssub.s32 %s16, 2
        // Predicated region
        $region57: #{tpu_custom_call.1} parent=55 // pred_check
          %p2572 = pneg %p197
        $region58: #{tpu_custom_call.1} parent=55 // pred_check_branch
          %2574 = sbr.rel (%p2572) target = $region60
        $region59: #{tpu_custom_call.1} parent=55 // pred_region
          %s2575 = sand.u32 %s182, 1
          %s2576 = scalar_lea.sflag [#allocation3], %s2575
          %s2577 = sand.u32 %s182, 1
          %s2578 = smul.addr %s2577, 512
          %s2579 = scalar_lea.vmem [#allocation2], %s2578
          %2580 = dma.done %s2576, 8192
        $region60: #{tpu_custom_call.1} parent=55 // pred_fallthru
          _
      $region56: #{tpu_custom_call.1} parent=5 // pred_fallthru
        _
    $region6: #{tpu_custom_call.1} parent=1 // loop_footer
      %s20 = sadd.s32 1, %s16
    $region7: #{tpu_custom_call.1} parent=1 // loop_footer_branch
      %15 = sbr.rel target = $region3
    $region8: #{tpu_custom_call.1} parent=1 // loop_exit
      _
    %2581 = vsyncpa [#allocation3], 1
    %s2582 = scalar_lea.sflag [#allocation3], 1
    %2583 = vsyncpa %s2582, 1

</llo_original>
